<compile_context>
chip_gen: v7x
topology: tpu7x:2x2x1
jax: 0.10.0
libtpu: 0.0.40
codegen_flags: <defaults>
</compile_context>

<pallas_src>
import functools

import jax
import jax.numpy as jnp
from jax import lax
from jax.experimental import pallas as pl
from jax.experimental.pallas import tpu as pltpu


def _conv_offsets(K):
    pad = K // 2
    return [(dh, dw) for dh in range(-pad, pad + 1) for dw in range(-pad, pad + 1)]


def residual_block_kernel(x_ref, mask_ref, w1_ref, b1_ref, w2s_ref, b2_ref, o_ref,
                          *, W, K, Cin, C1, C2, compute_dtype):
    """One grid step = Nb images flattened onto the lane axis.

    x_ref    : (Cin, Nb*H*W)        activations, channels on sublanes, batch*spatial on lanes
    mask_ref : (K*K, Nb*H*W)        precomputed per-image {0,1} boundary masks (resident)
    w1_ref   : (C1, K*K*Cin)        conv1 weights, tap-major / channel-minor columns
    b1_ref   : (C1, 1)
    w2s_ref  : (C2, K*K*C1 + Cin)   conv2 weights with the 1x1 shortcut appended
    b2_ref   : (C2, 1)
    o_ref    : (C2, Nb*H*W)         lane-dense output
    """
    L = x_ref.shape[1]
    offsets = _conv_offsets(K)

    x = x_ref[...]                                   # (Cin, L)
    w1 = w1_ref[...]
    w2s = w2s_ref[...]

    def conv_taps(act, w):
        # SAME-padding KxK conv as K*K accumulated MXU pushes; shifted taps are
        # built in-register with an XLU lane roll + a resident boundary mask.
        cin = act.shape[0]
        cout = w.shape[0]
        acc = jnp.zeros((cout, L), jnp.float32)
        for t, (dh, dw) in enumerate(offsets):
            off = dh * W + dw
            if off == 0:
                tap = act                             # center tap: always valid
            else:
                tap = pltpu.roll(act, shift=(-off) % L, axis=1) * mask_ref[t:t + 1, :]
            w_tap = w[:, t * cin:(t + 1) * cin]       # (cout, cin), static slice
            acc = acc + jnp.dot(w_tap.astype(compute_dtype), tap.astype(compute_dtype),
                                preferred_element_type=jnp.float32)
        return acc

    # conv1 + bias + ReLU
    y1 = jnp.maximum(conv_taps(x, w1) + b1_ref[...], 0.0)        # (C1, L) f32

    # conv2 (per-tap) + fused 1x1 shortcut (extra contraction columns) + bias + ReLU
    acc2 = conv_taps(y1, w2s)
    w_sc = w2s[:, K * K * C1:K * K * C1 + Cin]                   # (C2, Cin)
    acc2 = acc2 + jnp.dot(w_sc.astype(compute_dtype), x.astype(compute_dtype),
                          preferred_element_type=jnp.float32)
    o_ref[...] = jnp.maximum(acc2 + b2_ref[...], 0.0).astype(o_ref.dtype)


def prepare_params(w1, b1, w2, b2, ws):
    """One-time weight repacking (hoisted out of the per-call path).

    w1 : (K,K,Cin,C1) HWIO ; w2 : (K,K,C1,C2) HWIO ; ws : (Cin,C2) 1x1 shortcut.
    Returns tap-major / channel-minor flattened weights + column biases.
    """
    K, _, Cin, C1 = w1.shape
    C2 = w2.shape[-1]
    w1f = w1.reshape(K * K, Cin, C1).transpose(2, 0, 1).reshape(C1, K * K * Cin)
    w2f = w2.reshape(K * K, C1, C2).transpose(2, 0, 1).reshape(C2, K * K * C1)
    w2s = jnp.concatenate([w2f, ws.T], axis=1)        # (C2, K*K*C1 + Cin)
    return w1f, b1.reshape(C1, 1), w2s, b2.reshape(C2, 1)


def build_masks(H, W, K, Nb, dtype=jnp.float32):
    """(K*K, Nb*H*W) {0,1} masks from PER-IMAGE coordinates (period H*W)."""
    idx = jnp.arange(H * W)
    hpos, wpos = idx // W, idx % W
    pad = K // 2
    rows = []
    for dh in range(-pad, pad + 1):
        for dw in range(-pad, pad + 1):
            rows.append((hpos + dh >= 0) & (hpos + dh < H) &
                        (wpos + dw >= 0) & (wpos + dw < W))
    m = jnp.stack(rows).astype(dtype)                 # (K*K, H*W)
    return jnp.tile(m, (1, Nb))                       # (K*K, Nb*H*W)


def _pick_batch_block(n, cap=16):
    """Largest divisor of n (<= cap) that keeps >= 2 grid steps (v7x megacore)."""
    divisors = [d for d in range(1, min(n, cap) + 1) if n % d == 0]
    multi = [d for d in divisors if n // d >= 2]
    return max(multi) if multi else max(divisors)


def residual_block_pallas(x_nchw, w1f, b1r, w2s, b2r, *, K=3,
                          batch_block=None, compute_dtype=jnp.float32):
    """x_nchw: (N,Cin,H,W); weights already repacked by prepare_params()."""
    N, Cin, H, W = x_nchw.shape
    C1 = w1f.shape[0]
    C2 = w2s.shape[0]
    HW = H * W

    Nb = batch_block or _pick_batch_block(N)
    if (Nb * HW) % 128 != 0:
        Nb = N                                        # fall back to a single full-extent block
    assert N % Nb == 0
    L = Nb * HW

    # Layout plumbing only (no pad / slice passes): batch goes to the lane axis.
    x_lanes = x_nchw.reshape(N, Cin, HW).transpose(1, 0, 2).reshape(Cin, N * HW)
    masks = build_masks(H, W, K, Nb, dtype=x_nchw.dtype)

    kernel = functools.partial(residual_block_kernel, W=W, K=K,
                               Cin=Cin, C1=C1, C2=C2, compute_dtype=compute_dtype)

    out = pl.pallas_call(
        kernel,
        out_shape=jax.ShapeDtypeStruct((C2, N * HW), x_nchw.dtype),
        grid=(N // Nb,),
        in_specs=[
            pl.BlockSpec((Cin, L), lambda g: (0, g)),          # per-step activation slab
            pl.BlockSpec(masks.shape, lambda g: (0, 0)),       # resident in VMEM
            pl.BlockSpec(w1f.shape, lambda g: (0, 0)),
            pl.BlockSpec(b1r.shape, lambda g: (0, 0)),
            pl.BlockSpec(w2s.shape, lambda g: (0, 0)),
            pl.BlockSpec(b2r.shape, lambda g: (0, 0)),
        ],
        out_specs=pl.BlockSpec((C2, L), lambda g: (0, g)),
        compiler_params=pltpu.CompilerParams(
            dimension_semantics=("parallel",)),                # shard images across TCs (v7x)
    )(x_lanes, masks, w1f, b1r, w2s, b2r)

    # Back to PyTorch's NCHW layout.
    return out.reshape(C2, N, HW).transpose(1, 0, 2).reshape(N, C2, H, W)


def residual_block_ref(x_nchw, w1, b1, w2, b2, ws):
    """Pure-JAX NCHW reference for correctness checking."""
    dn = ("NCHW", "HWIO", "NCHW")
    y = lax.conv_general_dilated(x_nchw, w1, (1, 1), "SAME", dimension_numbers=dn)
    y = jnp.maximum(y + b1.reshape(1, -1, 1, 1), 0.0)
    y = lax.conv_general_dilated(y, w2, (1, 1), "SAME", dimension_numbers=dn)
    y = y + b2.reshape(1, -1, 1, 1)
    cin, c2 = ws.shape
    sc = lax.conv_general_dilated(x_nchw, ws.reshape(1, 1, cin, c2), (1, 1), "SAME",
                                  dimension_numbers=dn)
    return jnp.maximum(y + sc, 0.0)


if __name__ == "__main__":
    # ResidualBlock(in_channels=4, channels=[8, 6], kernel_sizes=[3, 3])
    N, Cin, H, W = 2, 4, 16, 16
    C1, C2, K = 8, 6, 3

    key = jax.random.PRNGKey(0)
    kx, k1, kb1, k2, kb2, ks = jax.random.split(key, 6)

    # Deterministic synthetic parameters (module __init__ only defines shapes).
    x = jax.random.normal(kx, (N, Cin, H, W), jnp.float32)          # NCHW like PyTorch
    w1 = 0.1 * jax.random.normal(k1, (K, K, Cin, C1), jnp.float32)  # HWIO
    b1 = 0.1 * jax.random.normal(kb1, (C1,), jnp.float32)
    w2 = 0.1 * jax.random.normal(k2, (K, K, C1, C2), jnp.float32)   # HWIO
    b2 = 0.1 * jax.random.normal(kb2, (C2,), jnp.float32)
    ws = 0.1 * jax.random.normal(ks, (Cin, C2), jnp.float32)        # 1x1 shortcut

    # One-time parameter repacking (hoisted out of the per-call path).
    w1f, b1r, w2s, b2r = prepare_params(w1, b1, w2, b2, ws)

    # compute_dtype=jnp.bfloat16 recommended on v6e/v7x (halves VMEM/HBM traffic);
    # kept f32 here for a tight reference check.
    out = residual_block_pallas(x, w1f, b1r, w2s, b2r, K=K, compute_dtype=jnp.float32)
    out = jax.block_until_ready(out)

    ref = residual_block_ref(x, w1, b1, w2, b2, ws)
    assert out.shape == (N, C2, H, W)
    assert jnp.allclose(out, ref, atol=1e-3, rtol=1e-3), "mismatch vs reference"

    print("KERNEL_OK")
</pallas_src>

<mosaic_0001>
module attributes {stable_mosaic.version = 11 : i64} {
  func.func @residual_block_kernel(%arg0: i32, %arg1: memref<4x256xf32, #tpu.memory_space<vmem>>, %arg2: memref<9x256xf32, #tpu.memory_space<vmem>>, %arg3: memref<8x36xf32, #tpu.memory_space<vmem>>, %arg4: memref<8x1xf32, #tpu.memory_space<vmem>>, %arg5: memref<6x76xf32, #tpu.memory_space<vmem>>, %arg6: memref<6x1xf32, #tpu.memory_space<vmem>>, %arg7: memref<6x256xf32, #tpu.memory_space<vmem>>) attributes {dimension_semantics = [#tpu.dimension_semantics<parallel>], iteration_bounds = array<i64: 2>, scalar_prefetch = 0 : i64, scratch_operands = 0 : i64, tpu.core_type = #tpu.core_type<tc>, window_params = [{transform_indices = @transform_0, window_bounds = array<i64: 4, 256>}, {pipeline_mode = #tpu.pipeline_mode<synchronous>, transform_indices = @transform_1, window_bounds = array<i64: 9, 256>}, {pipeline_mode = #tpu.pipeline_mode<synchronous>, transform_indices = @transform_2, window_bounds = array<i64: 8, 36>}, {pipeline_mode = #tpu.pipeline_mode<synchronous>, transform_indices = @transform_3, window_bounds = array<i64: 8, 1>}, {pipeline_mode = #tpu.pipeline_mode<synchronous>, transform_indices = @transform_4, window_bounds = array<i64: 6, 76>}, {pipeline_mode = #tpu.pipeline_mode<synchronous>, transform_indices = @transform_5, window_bounds = array<i64: 6, 1>}, {transform_indices = @transform_6, window_bounds = array<i64: 6, 256>}]} {
    %c0 = arith.constant 0 : index
    %c0_0 = arith.constant 0 : index
    %0 = vector.load %arg1[%c0, %c0_0] : memref<4x256xf32, #tpu.memory_space<vmem>>, vector<4x256xf32>
    %c0_1 = arith.constant 0 : index
    %c0_2 = arith.constant 0 : index
    %1 = vector.load %arg3[%c0_1, %c0_2] : memref<8x36xf32, #tpu.memory_space<vmem>>, vector<8x36xf32>
    %c0_3 = arith.constant 0 : index
    %c0_4 = arith.constant 0 : index
    %2 = vector.load %arg5[%c0_3, %c0_4] : memref<6x76xf32, #tpu.memory_space<vmem>>, vector<6x76xf32>
    %cst = arith.constant 0.000000e+00 : f32
    %3 = vector.broadcast %cst : f32 to vector<8x256xf32>
    %c17_i32 = arith.constant 17 : i32
    %4 = tpu.dynamic_rotate %0 by %c17_i32 dim 1 : vector<4x256xf32>, i32 -> vector<4x256xf32>
    %c0_5 = arith.constant 0 : index
    %c0_6 = arith.constant 0 : index
    %5 = vector.load %arg2[%c0_5, %c0_6] : memref<9x256xf32, #tpu.memory_space<vmem>>, vector<1x256xf32>
    %6 = vector.broadcast %5 : vector<1x256xf32> to vector<4x256xf32>
    %7 = arith.mulf %4, %6 : vector<4x256xf32>
    %8 = vector.extract_strided_slice %1 {offsets = [0, 0], sizes = [8, 4], strides = [1, 1]} : vector<8x36xf32> to vector<8x4xf32>
    %cst_7 = arith.constant dense<0.000000e+00> : vector<8x256xf32>
    %9 = tpu.matmul %8, %7, %cst_7 {dimension_numbers = #tpu.dot_dimension_numbers<[1], [0], [0], [1], [0, 0, 1, 1], [], []>} : vector<8x4xf32>, vector<4x256xf32>, vector<8x256xf32> -> vector<8x256xf32>
    %10 = arith.addf %3, %9 : vector<8x256xf32>
    %c16_i32 = arith.constant 16 : i32
    %11 = tpu.dynamic_rotate %0 by %c16_i32 dim 1 : vector<4x256xf32>, i32 -> vector<4x256xf32>
    %c1 = arith.constant 1 : index
    %c0_8 = arith.constant 0 : index
    %12 = vector.load %arg2[%c1, %c0_8] : memref<9x256xf32, #tpu.memory_space<vmem>>, vector<1x256xf32>
    %13 = vector.broadcast %12 : vector<1x256xf32> to vector<4x256xf32>
    %14 = arith.mulf %11, %13 : vector<4x256xf32>
    %15 = vector.extract_strided_slice %1 {offsets = [0, 4], sizes = [8, 4], strides = [1, 1]} : vector<8x36xf32> to vector<8x4xf32>
    %cst_9 = arith.constant dense<0.000000e+00> : vector<8x256xf32>
    %16 = tpu.matmul %15, %14, %cst_9 {dimension_numbers = #tpu.dot_dimension_numbers<[1], [0], [0], [1], [0, 0, 1, 1], [], []>} : vector<8x4xf32>, vector<4x256xf32>, vector<8x256xf32> -> vector<8x256xf32>
    %17 = arith.addf %10, %16 : vector<8x256xf32>
    %c15_i32 = arith.constant 15 : i32
    %18 = tpu.dynamic_rotate %0 by %c15_i32 dim 1 : vector<4x256xf32>, i32 -> vector<4x256xf32>
    %c2 = arith.constant 2 : index
    %c0_10 = arith.constant 0 : index
    %19 = vector.load %arg2[%c2, %c0_10] : memref<9x256xf32, #tpu.memory_space<vmem>>, vector<1x256xf32>
    %20 = vector.broadcast %19 : vector<1x256xf32> to vector<4x256xf32>
    %21 = arith.mulf %18, %20 : vector<4x256xf32>
    %22 = vector.extract_strided_slice %1 {offsets = [0, 8], sizes = [8, 4], strides = [1, 1]} : vector<8x36xf32> to vector<8x4xf32>
    %cst_11 = arith.constant dense<0.000000e+00> : vector<8x256xf32>
    %23 = tpu.matmul %22, %21, %cst_11 {dimension_numbers = #tpu.dot_dimension_numbers<[1], [0], [0], [1], [0, 0, 1, 1], [], []>} : vector<8x4xf32>, vector<4x256xf32>, vector<8x256xf32> -> vector<8x256xf32>
    %24 = arith.addf %17, %23 : vector<8x256xf32>
    %c1_i32 = arith.constant 1 : i32
    %25 = tpu.dynamic_rotate %0 by %c1_i32 dim 1 : vector<4x256xf32>, i32 -> vector<4x256xf32>
    %c3 = arith.constant 3 : index
    %c0_12 = arith.constant 0 : index
    %26 = vector.load %arg2[%c3, %c0_12] : memref<9x256xf32, #tpu.memory_space<vmem>>, vector<1x256xf32>
    %27 = vector.broadcast %26 : vector<1x256xf32> to vector<4x256xf32>
    %28 = arith.mulf %25, %27 : vector<4x256xf32>
    %29 = vector.extract_strided_slice %1 {offsets = [0, 12], sizes = [8, 4], strides = [1, 1]} : vector<8x36xf32> to vector<8x4xf32>
    %cst_13 = arith.constant dense<0.000000e+00> : vector<8x256xf32>
    %30 = tpu.matmul %29, %28, %cst_13 {dimension_numbers = #tpu.dot_dimension_numbers<[1], [0], [0], [1], [0, 0, 1, 1], [], []>} : vector<8x4xf32>, vector<4x256xf32>, vector<8x256xf32> -> vector<8x256xf32>
    %31 = arith.addf %24, %30 : vector<8x256xf32>
    %32 = vector.extract_strided_slice %1 {offsets = [0, 16], sizes = [8, 4], strides = [1, 1]} : vector<8x36xf32> to vector<8x4xf32>
    %cst_14 = arith.constant dense<0.000000e+00> : vector<8x256xf32>
    %33 = tpu.matmul %32, %0, %cst_14 {dimension_numbers = #tpu.dot_dimension_numbers<[1], [0], [0], [1], [0, 0, 1, 1], [], []>} : vector<8x4xf32>, vector<4x256xf32>, vector<8x256xf32> -> vector<8x256xf32>
    %34 = arith.addf %31, %33 : vector<8x256xf32>
    %c255_i32 = arith.constant 255 : i32
    %35 = tpu.dynamic_rotate %0 by %c255_i32 dim 1 : vector<4x256xf32>, i32 -> vector<4x256xf32>
    %c5 = arith.constant 5 : index
    %c0_15 = arith.constant 0 : index
    %36 = vector.load %arg2[%c5, %c0_15] : memref<9x256xf32, #tpu.memory_space<vmem>>, vector<1x256xf32>
    %37 = vector.broadcast %36 : vector<1x256xf32> to vector<4x256xf32>
    %38 = arith.mulf %35, %37 : vector<4x256xf32>
    %39 = vector.extract_strided_slice %1 {offsets = [0, 20], sizes = [8, 4], strides = [1, 1]} : vector<8x36xf32> to vector<8x4xf32>
    %cst_16 = arith.constant dense<0.000000e+00> : vector<8x256xf32>
    %40 = tpu.matmul %39, %38, %cst_16 {dimension_numbers = #tpu.dot_dimension_numbers<[1], [0], [0], [1], [0, 0, 1, 1], [], []>} : vector<8x4xf32>, vector<4x256xf32>, vector<8x256xf32> -> vector<8x256xf32>
    %41 = arith.addf %34, %40 : vector<8x256xf32>
    %c241_i32 = arith.constant 241 : i32
    %42 = tpu.dynamic_rotate %0 by %c241_i32 dim 1 : vector<4x256xf32>, i32 -> vector<4x256xf32>
    %c6 = arith.constant 6 : index
    %c0_17 = arith.constant 0 : index
    %43 = vector.load %arg2[%c6, %c0_17] : memref<9x256xf32, #tpu.memory_space<vmem>>, vector<1x256xf32>
    %44 = vector.broadcast %43 : vector<1x256xf32> to vector<4x256xf32>
    %45 = arith.mulf %42, %44 : vector<4x256xf32>
    %46 = vector.extract_strided_slice %1 {offsets = [0, 24], sizes = [8, 4], strides = [1, 1]} : vector<8x36xf32> to vector<8x4xf32>
    %cst_18 = arith.constant dense<0.000000e+00> : vector<8x256xf32>
    %47 = tpu.matmul %46, %45, %cst_18 {dimension_numbers = #tpu.dot_dimension_numbers<[1], [0], [0], [1], [0, 0, 1, 1], [], []>} : vector<8x4xf32>, vector<4x256xf32>, vector<8x256xf32> -> vector<8x256xf32>
    %48 = arith.addf %41, %47 : vector<8x256xf32>
    %c240_i32 = arith.constant 240 : i32
    %49 = tpu.dynamic_rotate %0 by %c240_i32 dim 1 : vector<4x256xf32>, i32 -> vector<4x256xf32>
    %c7 = arith.constant 7 : index
    %c0_19 = arith.constant 0 : index
    %50 = vector.load %arg2[%c7, %c0_19] : memref<9x256xf32, #tpu.memory_space<vmem>>, vector<1x256xf32>
    %51 = vector.broadcast %50 : vector<1x256xf32> to vector<4x256xf32>
    %52 = arith.mulf %49, %51 : vector<4x256xf32>
    %53 = vector.extract_strided_slice %1 {offsets = [0, 28], sizes = [8, 4], strides = [1, 1]} : vector<8x36xf32> to vector<8x4xf32>
    %cst_20 = arith.constant dense<0.000000e+00> : vector<8x256xf32>
    %54 = tpu.matmul %53, %52, %cst_20 {dimension_numbers = #tpu.dot_dimension_numbers<[1], [0], [0], [1], [0, 0, 1, 1], [], []>} : vector<8x4xf32>, vector<4x256xf32>, vector<8x256xf32> -> vector<8x256xf32>
    %55 = arith.addf %48, %54 : vector<8x256xf32>
    %c239_i32 = arith.constant 239 : i32
    %56 = tpu.dynamic_rotate %0 by %c239_i32 dim 1 : vector<4x256xf32>, i32 -> vector<4x256xf32>
    %c8 = arith.constant 8 : index
    %c0_21 = arith.constant 0 : index
    %57 = vector.load %arg2[%c8, %c0_21] : memref<9x256xf32, #tpu.memory_space<vmem>>, vector<1x256xf32>
    %58 = vector.broadcast %57 : vector<1x256xf32> to vector<4x256xf32>
    %59 = arith.mulf %56, %58 : vector<4x256xf32>
    %60 = vector.extract_strided_slice %1 {offsets = [0, 32], sizes = [8, 4], strides = [1, 1]} : vector<8x36xf32> to vector<8x4xf32>
    %cst_22 = arith.constant dense<0.000000e+00> : vector<8x256xf32>
    %61 = tpu.matmul %60, %59, %cst_22 {dimension_numbers = #tpu.dot_dimension_numbers<[1], [0], [0], [1], [0, 0, 1, 1], [], []>} : vector<8x4xf32>, vector<4x256xf32>, vector<8x256xf32> -> vector<8x256xf32>
    %62 = arith.addf %55, %61 : vector<8x256xf32>
    %c0_23 = arith.constant 0 : index
    %c0_24 = arith.constant 0 : index
    %63 = vector.load %arg4[%c0_23, %c0_24] : memref<8x1xf32, #tpu.memory_space<vmem>>, vector<8x1xf32>
    %64 = vector.broadcast %63 : vector<8x1xf32> to vector<8x256xf32>
    %65 = arith.addf %62, %64 : vector<8x256xf32>
    %cst_25 = arith.constant 0.000000e+00 : f32
    %66 = vector.broadcast %cst_25 : f32 to vector<8x256xf32>
    %67 = arith.maximumf %65, %66 : vector<8x256xf32>
    %cst_26 = arith.constant 0.000000e+00 : f32
    %68 = vector.broadcast %cst_26 : f32 to vector<6x256xf32>
    %c17_i32_27 = arith.constant 17 : i32
    %69 = tpu.dynamic_rotate %67 by %c17_i32_27 dim 1 : vector<8x256xf32>, i32 -> vector<8x256xf32>
    %c0_28 = arith.constant 0 : index
    %c0_29 = arith.constant 0 : index
    %70 = vector.load %arg2[%c0_28, %c0_29] : memref<9x256xf32, #tpu.memory_space<vmem>>, vector<1x256xf32>
    %71 = vector.broadcast %70 : vector<1x256xf32> to vector<8x256xf32>
    %72 = arith.mulf %69, %71 : vector<8x256xf32>
    %73 = vector.extract_strided_slice %2 {offsets = [0, 0], sizes = [6, 8], strides = [1, 1]} : vector<6x76xf32> to vector<6x8xf32>
    %cst_30 = arith.constant dense<0.000000e+00> : vector<6x256xf32>
    %74 = tpu.matmul %73, %72, %cst_30 {dimension_numbers = #tpu.dot_dimension_numbers<[1], [0], [0], [1], [0, 0, 1, 1], [], []>} : vector<6x8xf32>, vector<8x256xf32>, vector<6x256xf32> -> vector<6x256xf32>
    %75 = arith.addf %68, %74 : vector<6x256xf32>
    %c16_i32_31 = arith.constant 16 : i32
    %76 = tpu.dynamic_rotate %67 by %c16_i32_31 dim 1 : vector<8x256xf32>, i32 -> vector<8x256xf32>
    %c1_32 = arith.constant 1 : index
    %c0_33 = arith.constant 0 : index
    %77 = vector.load %arg2[%c1_32, %c0_33] : memref<9x256xf32, #tpu.memory_space<vmem>>, vector<1x256xf32>
    %78 = vector.broadcast %77 : vector<1x256xf32> to vector<8x256xf32>
    %79 = arith.mulf %76, %78 : vector<8x256xf32>
    %80 = vector.extract_strided_slice %2 {offsets = [0, 8], sizes = [6, 8], strides = [1, 1]} : vector<6x76xf32> to vector<6x8xf32>
    %cst_34 = arith.constant dense<0.000000e+00> : vector<6x256xf32>
    %81 = tpu.matmul %80, %79, %cst_34 {dimension_numbers = #tpu.dot_dimension_numbers<[1], [0], [0], [1], [0, 0, 1, 1], [], []>} : vector<6x8xf32>, vector<8x256xf32>, vector<6x256xf32> -> vector<6x256xf32>
    %82 = arith.addf %75, %81 : vector<6x256xf32>
    %c15_i32_35 = arith.constant 15 : i32
    %83 = tpu.dynamic_rotate %67 by %c15_i32_35 dim 1 : vector<8x256xf32>, i32 -> vector<8x256xf32>
    %c2_36 = arith.constant 2 : index
    %c0_37 = arith.constant 0 : index
    %84 = vector.load %arg2[%c2_36, %c0_37] : memref<9x256xf32, #tpu.memory_space<vmem>>, vector<1x256xf32>
    %85 = vector.broadcast %84 : vector<1x256xf32> to vector<8x256xf32>
    %86 = arith.mulf %83, %85 : vector<8x256xf32>
    %87 = vector.extract_strided_slice %2 {offsets = [0, 16], sizes = [6, 8], strides = [1, 1]} : vector<6x76xf32> to vector<6x8xf32>
    %cst_38 = arith.constant dense<0.000000e+00> : vector<6x256xf32>
    %88 = tpu.matmul %87, %86, %cst_38 {dimension_numbers = #tpu.dot_dimension_numbers<[1], [0], [0], [1], [0, 0, 1, 1], [], []>} : vector<6x8xf32>, vector<8x256xf32>, vector<6x256xf32> -> vector<6x256xf32>
    %89 = arith.addf %82, %88 : vector<6x256xf32>
    %c1_i32_39 = arith.constant 1 : i32
    %90 = tpu.dynamic_rotate %67 by %c1_i32_39 dim 1 : vector<8x256xf32>, i32 -> vector<8x256xf32>
    %c3_40 = arith.constant 3 : index
    %c0_41 = arith.constant 0 : index
    %91 = vector.load %arg2[%c3_40, %c0_41] : memref<9x256xf32, #tpu.memory_space<vmem>>, vector<1x256xf32>
    %92 = vector.broadcast %91 : vector<1x256xf32> to vector<8x256xf32>
    %93 = arith.mulf %90, %92 : vector<8x256xf32>
    %94 = vector.extract_strided_slice %2 {offsets = [0, 24], sizes = [6, 8], strides = [1, 1]} : vector<6x76xf32> to vector<6x8xf32>
    %cst_42 = arith.constant dense<0.000000e+00> : vector<6x256xf32>
    %95 = tpu.matmul %94, %93, %cst_42 {dimension_numbers = #tpu.dot_dimension_numbers<[1], [0], [0], [1], [0, 0, 1, 1], [], []>} : vector<6x8xf32>, vector<8x256xf32>, vector<6x256xf32> -> vector<6x256xf32>
    %96 = arith.addf %89, %95 : vector<6x256xf32>
    %97 = vector.extract_strided_slice %2 {offsets = [0, 32], sizes = [6, 8], strides = [1, 1]} : vector<6x76xf32> to vector<6x8xf32>
    %cst_43 = arith.constant dense<0.000000e+00> : vector<6x256xf32>
    %98 = tpu.matmul %97, %67, %cst_43 {dimension_numbers = #tpu.dot_dimension_numbers<[1], [0], [0], [1], [0, 0, 1, 1], [], []>} : vector<6x8xf32>, vector<8x256xf32>, vector<6x256xf32> -> vector<6x256xf32>
    %99 = arith.addf %96, %98 : vector<6x256xf32>
    %c255_i32_44 = arith.constant 255 : i32
    %100 = tpu.dynamic_rotate %67 by %c255_i32_44 dim 1 : vector<8x256xf32>, i32 -> vector<8x256xf32>
    %c5_45 = arith.constant 5 : index
    %c0_46 = arith.constant 0 : index
    %101 = vector.load %arg2[%c5_45, %c0_46] : memref<9x256xf32, #tpu.memory_space<vmem>>, vector<1x256xf32>
    %102 = vector.broadcast %101 : vector<1x256xf32> to vector<8x256xf32>
    %103 = arith.mulf %100, %102 : vector<8x256xf32>
    %104 = vector.extract_strided_slice %2 {offsets = [0, 40], sizes = [6, 8], strides = [1, 1]} : vector<6x76xf32> to vector<6x8xf32>
    %cst_47 = arith.constant dense<0.000000e+00> : vector<6x256xf32>
    %105 = tpu.matmul %104, %103, %cst_47 {dimension_numbers = #tpu.dot_dimension_numbers<[1], [0], [0], [1], [0, 0, 1, 1], [], []>} : vector<6x8xf32>, vector<8x256xf32>, vector<6x256xf32> -> vector<6x256xf32>
    %106 = arith.addf %99, %105 : vector<6x256xf32>
    %c241_i32_48 = arith.constant 241 : i32
    %107 = tpu.dynamic_rotate %67 by %c241_i32_48 dim 1 : vector<8x256xf32>, i32 -> vector<8x256xf32>
    %c6_49 = arith.constant 6 : index
    %c0_50 = arith.constant 0 : index
    %108 = vector.load %arg2[%c6_49, %c0_50] : memref<9x256xf32, #tpu.memory_space<vmem>>, vector<1x256xf32>
    %109 = vector.broadcast %108 : vector<1x256xf32> to vector<8x256xf32>
    %110 = arith.mulf %107, %109 : vector<8x256xf32>
    %111 = vector.extract_strided_slice %2 {offsets = [0, 48], sizes = [6, 8], strides = [1, 1]} : vector<6x76xf32> to vector<6x8xf32>
    %cst_51 = arith.constant dense<0.000000e+00> : vector<6x256xf32>
    %112 = tpu.matmul %111, %110, %cst_51 {dimension_numbers = #tpu.dot_dimension_numbers<[1], [0], [0], [1], [0, 0, 1, 1], [], []>} : vector<6x8xf32>, vector<8x256xf32>, vector<6x256xf32> -> vector<6x256xf32>
    %113 = arith.addf %106, %112 : vector<6x256xf32>
    %c240_i32_52 = arith.constant 240 : i32
    %114 = tpu.dynamic_rotate %67 by %c240_i32_52 dim 1 : vector<8x256xf32>, i32 -> vector<8x256xf32>
    %c7_53 = arith.constant 7 : index
    %c0_54 = arith.constant 0 : index
    %115 = vector.load %arg2[%c7_53, %c0_54] : memref<9x256xf32, #tpu.memory_space<vmem>>, vector<1x256xf32>
    %116 = vector.broadcast %115 : vector<1x256xf32> to vector<8x256xf32>
    %117 = arith.mulf %114, %116 : vector<8x256xf32>
    %118 = vector.extract_strided_slice %2 {offsets = [0, 56], sizes = [6, 8], strides = [1, 1]} : vector<6x76xf32> to vector<6x8xf32>
    %cst_55 = arith.constant dense<0.000000e+00> : vector<6x256xf32>
    %119 = tpu.matmul %118, %117, %cst_55 {dimension_numbers = #tpu.dot_dimension_numbers<[1], [0], [0], [1], [0, 0, 1, 1], [], []>} : vector<6x8xf32>, vector<8x256xf32>, vector<6x256xf32> -> vector<6x256xf32>
    %120 = arith.addf %113, %119 : vector<6x256xf32>
    %c239_i32_56 = arith.constant 239 : i32
    %121 = tpu.dynamic_rotate %67 by %c239_i32_56 dim 1 : vector<8x256xf32>, i32 -> vector<8x256xf32>
    %c8_57 = arith.constant 8 : index
    %c0_58 = arith.constant 0 : index
    %122 = vector.load %arg2[%c8_57, %c0_58] : memref<9x256xf32, #tpu.memory_space<vmem>>, vector<1x256xf32>
    %123 = vector.broadcast %122 : vector<1x256xf32> to vector<8x256xf32>
    %124 = arith.mulf %121, %123 : vector<8x256xf32>
    %125 = vector.extract_strided_slice %2 {offsets = [0, 64], sizes = [6, 8], strides = [1, 1]} : vector<6x76xf32> to vector<6x8xf32>
    %cst_59 = arith.constant dense<0.000000e+00> : vector<6x256xf32>
    %126 = tpu.matmul %125, %124, %cst_59 {dimension_numbers = #tpu.dot_dimension_numbers<[1], [0], [0], [1], [0, 0, 1, 1], [], []>} : vector<6x8xf32>, vector<8x256xf32>, vector<6x256xf32> -> vector<6x256xf32>
    %127 = arith.addf %120, %126 : vector<6x256xf32>
    %128 = vector.extract_strided_slice %2 {offsets = [0, 72], sizes = [6, 4], strides = [1, 1]} : vector<6x76xf32> to vector<6x4xf32>
    %cst_60 = arith.constant dense<0.000000e+00> : vector<6x256xf32>
    %129 = tpu.matmul %128, %0, %cst_60 {dimension_numbers = #tpu.dot_dimension_numbers<[1], [0], [0], [1], [0, 0, 1, 1], [], []>} : vector<6x4xf32>, vector<4x256xf32>, vector<6x256xf32> -> vector<6x256xf32>
    %130 = arith.addf %127, %129 : vector<6x256xf32>
    %c0_61 = arith.constant 0 : index
    %c0_62 = arith.constant 0 : index
    %131 = vector.load %arg6[%c0_61, %c0_62] : memref<6x1xf32, #tpu.memory_space<vmem>>, vector<6x1xf32>
    %132 = vector.broadcast %131 : vector<6x1xf32> to vector<6x256xf32>
    %133 = arith.addf %130, %132 : vector<6x256xf32>
    %cst_63 = arith.constant 0.000000e+00 : f32
    %134 = vector.broadcast %cst_63 : f32 to vector<6x256xf32>
    %135 = arith.maximumf %133, %134 : vector<6x256xf32>
    %c0_64 = arith.constant 0 : index
    %c0_65 = arith.constant 0 : index
    %136 = vector.load %arg7[%c0_64, %c0_65] : memref<6x256xf32, #tpu.memory_space<vmem>>, vector<6x256xf32>
    tpu.vector_store %arg7[%c0_64, %c0_65], %135 {strides = array<i32>} : memref<6x256xf32, #tpu.memory_space<vmem>>, vector<6x256xf32>,
    return
  }
  func.func @transform_0(%arg0: i32) -> (i32, i32) {
    %c0_i32 = arith.constant 0 : i32
    %c0_i32_0 = arith.constant 0 : i32
    return %c0_i32, %arg0 : i32, i32
  }
  func.func @transform_1(%arg0: i32) -> (i32, i32) {
    %c0_i32 = arith.constant 0 : i32
    %c0_i32_0 = arith.constant 0 : i32
    %c0_i32_1 = arith.constant 0 : i32
    return %c0_i32, %c0_i32_0 : i32, i32
  }
  func.func @transform_2(%arg0: i32) -> (i32, i32) {
    %c0_i32 = arith.constant 0 : i32
    %c0_i32_0 = arith.constant 0 : i32
    %c0_i32_1 = arith.constant 0 : i32
    return %c0_i32, %c0_i32_0 : i32, i32
  }
  func.func @transform_3(%arg0: i32) -> (i32, i32) {
    %c0_i32 = arith.constant 0 : i32
    %c0_i32_0 = arith.constant 0 : i32
    %c0_i32_1 = arith.constant 0 : i32
    return %c0_i32, %c0_i32_0 : i32, i32
  }
  func.func @transform_4(%arg0: i32) -> (i32, i32) {
    %c0_i32 = arith.constant 0 : i32
    %c0_i32_0 = arith.constant 0 : i32
    %c0_i32_1 = arith.constant 0 : i32
    return %c0_i32, %c0_i32_0 : i32, i32
  }
  func.func @transform_5(%arg0: i32) -> (i32, i32) {
    %c0_i32 = arith.constant 0 : i32
    %c0_i32_0 = arith.constant 0 : i32
    %c0_i32_1 = arith.constant 0 : i32
    return %c0_i32, %c0_i32_0 : i32, i32
  }
  func.func @transform_6(%arg0: i32) -> (i32, i32) {
    %c0_i32 = arith.constant 0 : i32
    %c0_i32_0 = arith.constant 0 : i32
    return %c0_i32, %arg0 : i32, i32
  }
}

</mosaic_0001>

<llo_original>
// kernel: tpu_custom_call.1
$region0: #{tpu_custom_call.1}
  #allocation0 [shape = 'u32[]', space=smem, size = 0x4, offset = 0x4, fixed_abs, tag = 'smem constant byte address 0x4 - core index']
  #allocation1 [shape = 'u32[144,128]{1,0:T(1,128)}', space=vmem, size = 0x12000, scoped, tag = 'internal scratch']
  %s0 = inlined_call_operand.vmem [shape: f32[4,512], index: 0, kind: input, shape index: {}]
  %s1 = inlined_call_operand.hbm [shape: f32[9,256], index: 1, kind: input, shape index: {}]
  %s2 = inlined_call_operand.vmem [shape: f32[8,36], index: 2, kind: input, shape index: {}]
  %s3 = inlined_call_operand.vmem [shape: f32[8,1], index: 3, kind: input, shape index: {}]
  %s4 = inlined_call_operand.vmem [shape: f32[6,76], index: 4, kind: input, shape index: {}]
  %s5 = inlined_call_operand.vmem [shape: f32[6,1], index: 5, kind: input, shape index: {}]
  %s6 = inlined_call_operand.hbm [shape: f32[6,512], index: 6, kind: output, shape index: {}]
  %s7 = sld [smem:[#allocation0]]
  $region61: #{tpu_custom_call.1} parent=0
    _
  %s9 = ssub.s32 1, %s7
  %s10 = scalar_select 0, %s9, %s7
  $region1: #{tpu_custom_call.1} parent=0
    #allocation2 [shape = 'u8[16384]{0}', space=vmem, size = 0x4000, scoped, tag = 'input window, operand 1, single buffered']
    #allocation3 [shape = 's32[2]{0}', space=sflag, size = 0x8, scoped, tag = 'scoped memory for tpu_custom_call.1']
    #allocation4 [shape = 's32[2]{0}', space=sflag, size = 0x8, scoped, tag = 'scoped memory for tpu_custom_call.1']
    #allocation5 [shape = 'u8[16384]{0}', space=vmem, size = 0x4000, scoped, tag = 'output window, operand 0']
    %11 = vsyncpa [#allocation3], 0
    %12 = vsyncpa [#allocation4], 0
    %s13 = scalar_lea.sflag [#allocation4], 1
    %14 = vsyncpa %s13, 0
    loop: start=0, step=1, limit=4
    $region2: #{tpu_custom_call.1} parent=1 // loop_pre_header
      _
    $region3: #{tpu_custom_call.1} parent=1 // loop_header
      %s16 = sphi 0, %s20
      %p17 = scmp.ge.s32.totalorder %s16, 4
      %s26 = sphi 0, %s28
      %s29 = sphi 0, %s26
      %s30 = sphi 0, %s29
      %s46 = sphi 0, %s30
      %s50 = sphi 0, %s50
      %s52 = sphi 0, %s50
      %s53 = sphi 0, %s52
      %s67 = sphi 0, %s53
      %s71 = sphi 0, %s71
      %s73 = sphi 0, %s71
      %s74 = sphi 0, %s73
      %s88 = sphi 0, %s74
      %s92 = sphi 0, %s92
      %s94 = sphi 0, %s92
      %s95 = sphi 0, %s94
      %s109 = sphi 0, %s95
      %s113 = sphi 0, %s113
      %s115 = sphi 0, %s113
      %s116 = sphi 0, %s115
      %s130 = sphi 0, %s116
      %s134 = sphi 0, %s134
      %s136 = sphi 0, %s134
      %s137 = sphi 0, %s136
      %s151 = sphi 0, %s137
      %s157 = sphi 0, %s159
      %s160 = sphi 0, %s157
      %s161 = sphi 0, %s160
      %s177 = sphi 0, %s161
    $region4: #{tpu_custom_call.1} parent=1 // loop_header_branch
      %19 = sbr.rel (%p17) target = $region8
    $region5: #{tpu_custom_call.1} parent=1 // loop_body
      %s21 = ssub.s32 %s16, 1
      %s22 = ssub.s32 %s16, 2
      %s23 = sadd.s32 %s16, 1
      %s24 = ssub.s32 %s16, %s23
      %p25 = scmp.eq.s32.totalorder %s24, 0
      %s27 = sadd.s32 %s26, 1
      %s28 = scalar_select %p25, %s26, %s27
      %p31 = pneg %p25
      %p32 = scmp.eq.s32.totalorder %s16, 1
      %p33 = por %p31, %p32
      %p34 = scmp.ne.s32.totalorder %s26, %s29
      %p35 = scmp.eq.s32.totalorder %s16, 0
      %p36 = por %p34, %p35
      %p37 = scmp.ne.s32.totalorder %s26, %s29
      %p38 = scmp.eq.s32.totalorder %s21, 1
      %p39 = por %p37, %p38
      %p40 = scmp.ne.s32.totalorder %s29, %s30
      %p41 = scmp.eq.s32.totalorder %s21, 0
      %p42 = por %p40, %p41
      %p43 = scmp.ne.s32.totalorder %s29, %s30
      %p44 = scmp.eq.s32.totalorder %s22, 1
      %p45 = por %p43, %p44
      %p47 = scmp.ne.s32.totalorder %s30, %s46
      %p48 = scmp.eq.s32.totalorder %s22, 0
      %p49 = por %p47, %p48
      %s51 = sadd.s32 %s50, 1
      %p54 = scmp.eq.s32.totalorder %s16, 1
      %p55 = scmp.ne.s32.totalorder %s50, %s52
      %p56 = scmp.eq.s32.totalorder %s16, 0
      %p57 = por %p55, %p56
      %p58 = scmp.ne.s32.totalorder %s50, %s52
      %p59 = scmp.eq.s32.totalorder %s21, 1
      %p60 = por %p58, %p59
      %p61 = scmp.ne.s32.totalorder %s52, %s53
      %p62 = scmp.eq.s32.totalorder %s21, 0
      %p63 = por %p61, %p62
      %p64 = scmp.ne.s32.totalorder %s52, %s53
      %p65 = scmp.eq.s32.totalorder %s22, 1
      %p66 = por %p64, %p65
      %p68 = scmp.ne.s32.totalorder %s53, %s67
      %p69 = scmp.eq.s32.totalorder %s22, 0
      %p70 = por %p68, %p69
      %s72 = sadd.s32 %s71, 1
      %p75 = scmp.eq.s32.totalorder %s16, 1
      %p76 = scmp.ne.s32.totalorder %s71, %s73
      %p77 = scmp.eq.s32.totalorder %s16, 0
      %p78 = por %p76, %p77
      %p79 = scmp.ne.s32.totalorder %s71, %s73
      %p80 = scmp.eq.s32.totalorder %s21, 1
      %p81 = por %p79, %p80
      %p82 = scmp.ne.s32.totalorder %s73, %s74
      %p83 = scmp.eq.s32.totalorder %s21, 0
      %p84 = por %p82, %p83
      %p85 = scmp.ne.s32.totalorder %s73, %s74
      %p86 = scmp.eq.s32.totalorder %s22, 1
      %p87 = por %p85, %p86
      %p89 = scmp.ne.s32.totalorder %s74, %s88
      %p90 = scmp.eq.s32.totalorder %s22, 0
      %p91 = por %p89, %p90
      %s93 = sadd.s32 %s92, 1
      %p96 = scmp.eq.s32.totalorder %s16, 1
      %p97 = scmp.ne.s32.totalorder %s92, %s94
      %p98 = scmp.eq.s32.totalorder %s16, 0
      %p99 = por %p97, %p98
      %p100 = scmp.ne.s32.totalorder %s92, %s94
      %p101 = scmp.eq.s32.totalorder %s21, 1
      %p102 = por %p100, %p101
      %p103 = scmp.ne.s32.totalorder %s94, %s95
      %p104 = scmp.eq.s32.totalorder %s21, 0
      %p105 = por %p103, %p104
      %p106 = scmp.ne.s32.totalorder %s94, %s95
      %p107 = scmp.eq.s32.totalorder %s22, 1
      %p108 = por %p106, %p107
      %p110 = scmp.ne.s32.totalorder %s95, %s109
      %p111 = scmp.eq.s32.totalorder %s22, 0
      %p112 = por %p110, %p111
      %s114 = sadd.s32 %s113, 1
      %p117 = scmp.eq.s32.totalorder %s16, 1
      %p118 = scmp.ne.s32.totalorder %s113, %s115
      %p119 = scmp.eq.s32.totalorder %s16, 0
      %p120 = por %p118, %p119
      %p121 = scmp.ne.s32.totalorder %s113, %s115
      %p122 = scmp.eq.s32.totalorder %s21, 1
      %p123 = por %p121, %p122
      %p124 = scmp.ne.s32.totalorder %s115, %s116
      %p125 = scmp.eq.s32.totalorder %s21, 0
      %p126 = por %p124, %p125
      %p127 = scmp.ne.s32.totalorder %s115, %s116
      %p128 = scmp.eq.s32.totalorder %s22, 1
      %p129 = por %p127, %p128
      %p131 = scmp.ne.s32.totalorder %s116, %s130
      %p132 = scmp.eq.s32.totalorder %s22, 0
      %p133 = por %p131, %p132
      %s135 = sadd.s32 %s134, 1
      %p138 = scmp.eq.s32.totalorder %s16, 1
      %p139 = scmp.ne.s32.totalorder %s134, %s136
      %p140 = scmp.eq.s32.totalorder %s16, 0
      %p141 = por %p139, %p140
      %p142 = scmp.ne.s32.totalorder %s134, %s136
      %p143 = scmp.eq.s32.totalorder %s21, 1
      %p144 = por %p142, %p143
      %p145 = scmp.ne.s32.totalorder %s136, %s137
      %p146 = scmp.eq.s32.totalorder %s21, 0
      %p147 = por %p145, %p146
      %p148 = scmp.ne.s32.totalorder %s136, %s137
      %p149 = scmp.eq.s32.totalorder %s22, 1
      %p150 = por %p148, %p149
      %p152 = scmp.ne.s32.totalorder %s137, %s151
      %p153 = scmp.eq.s32.totalorder %s22, 0
      %p154 = por %p152, %p153
      %s155 = ssub.s32 %s16, %s23
      %p156 = scmp.eq.s32.totalorder %s155, 0
      %s158 = sadd.s32 %s157, 1
      %s159 = scalar_select %p156, %s157, %s158
      %p162 = pneg %p156
      %p163 = scmp.eq.s32.totalorder %s16, 1
      %p164 = por %p162, %p163
      %p165 = scmp.ne.s32.totalorder %s157, %s160
      %p166 = scmp.eq.s32.totalorder %s16, 0
      %p167 = por %p165, %p166
      %p168 = scmp.ne.s32.totalorder %s157, %s160
      %p169 = scmp.eq.s32.totalorder %s21, 1
      %p170 = por %p168, %p169
      %p171 = scmp.ne.s32.totalorder %s160, %s161
      %p172 = scmp.eq.s32.totalorder %s21, 0
      %p173 = por %p171, %p172
      %p174 = scmp.ne.s32.totalorder %s160, %s161
      %p175 = scmp.eq.s32.totalorder %s22, 1
      %p176 = por %p174, %p175
      %p178 = scmp.ne.s32.totalorder %s161, %s177
      %p179 = scmp.eq.s32.totalorder %s22, 0
      %p180 = por %p178, %p179
      %p181 = scmp.le.s32.totalorder 1, %s16
      %p182 = scmp.lt.s32.totalorder %s16, 3
      %p183 = pnand %p181, %p182
      %p184 = pneg %p183
      // Predicated region
      $region9: #{tpu_custom_call.1} parent=5 // pred_check
        _
      $region10: #{tpu_custom_call.1} parent=5 // pred_check_branch
        %186 = sbr.rel (%p183) target = $region12
      $region11: #{tpu_custom_call.1} parent=5 // pred_region
        %s187 = ssub.s32 %s16, 1
        // Predicated region
        $region13: #{tpu_custom_call.1} parent=11 // pred_check
          %p188 = pneg %p63
        $region14: #{tpu_custom_call.1} parent=11 // pred_check_branch
          %190 = sbr.rel (%p188) target = $region16
        $region15: #{tpu_custom_call.1} parent=11 // pred_region
          %s192 = ssub.s32 512, 512
          %193 = vsyncadd [#allocation3], %s192
          %s194 = sshll.u32 [#allocation2], 4
          %s195 = int_to_ptr.vmem [resolvable:$true] %s194
          %200 = dma.hbm_to_vmem [thread:$0]  %s1, 512, %s195, [#allocation3], 256, 256, 16
        $region16: #{tpu_custom_call.1} parent=11 // pred_fallthru
          _
        // Predicated region
        $region17: #{tpu_custom_call.1} parent=11 // pred_check
          %p201 = pneg %p84
        $region18: #{tpu_custom_call.1} parent=11 // pred_check_branch
          %203 = sbr.rel (%p201) target = $region20
        $region19: #{tpu_custom_call.1} parent=11 // pred_region
          _
        $region20: #{tpu_custom_call.1} parent=11 // pred_fallthru
          _
        // Predicated region
        $region21: #{tpu_custom_call.1} parent=11 // pred_check
          %p204 = pneg %p105
        $region22: #{tpu_custom_call.1} parent=11 // pred_check_branch
          %206 = sbr.rel (%p204) target = $region24
        $region23: #{tpu_custom_call.1} parent=11 // pred_region
          _
        $region24: #{tpu_custom_call.1} parent=11 // pred_fallthru
          _
        // Predicated region
        $region25: #{tpu_custom_call.1} parent=11 // pred_check
          %p207 = pneg %p126
        $region26: #{tpu_custom_call.1} parent=11 // pred_check_branch
          %209 = sbr.rel (%p207) target = $region28
        $region27: #{tpu_custom_call.1} parent=11 // pred_region
          _
        $region28: #{tpu_custom_call.1} parent=11 // pred_fallthru
          _
        // Predicated region
        $region29: #{tpu_custom_call.1} parent=11 // pred_check
          %p210 = pneg %p147
        $region30: #{tpu_custom_call.1} parent=11 // pred_check_branch
          %212 = sbr.rel (%p210) target = $region32
        $region31: #{tpu_custom_call.1} parent=11 // pred_region
          _
        $region32: #{tpu_custom_call.1} parent=11 // pred_fallthru
          _
      $region12: #{tpu_custom_call.1} parent=5 // pred_fallthru
        _
      %p213 = scmp.lt.s32.totalorder %s16, 2
      // Predicated region
      $region33: #{tpu_custom_call.1} parent=5 // pred_check
        %p214 = pneg %p213
      $region34: #{tpu_custom_call.1} parent=5 // pred_check_branch
        %216 = sbr.rel (%p214) target = $region36
      $region35: #{tpu_custom_call.1} parent=5 // pred_region
        // Predicated region
        $region37: #{tpu_custom_call.1} parent=35 // pred_check
          %p217 = pneg %p36
        $region38: #{tpu_custom_call.1} parent=35 // pred_check_branch
          %219 = sbr.rel (%p217) target = $region40
        $region39: #{tpu_custom_call.1} parent=35 // pred_region
          %s220 = smul.u32 2, %s16
          %p221 = scmp.lt.s32.totalorder %s220, 3
          %s222 = scalar_select %p221, %s220, 3
          %s223 = smul.addr %s222, 4
          %s224 = scalar_lea.vmem %s0, %s223
          %s225 = smul.u32 2, %s16
        $region40: #{tpu_custom_call.1} parent=35 // pred_fallthru
          _
      $region36: #{tpu_custom_call.1} parent=5 // pred_fallthru
        _
      %p226 = scmp.le.s32.totalorder 1, %s16
      %p227 = scmp.lt.s32.totalorder %s16, 3
      %p228 = pnand %p226, %p227
      %p229 = pneg %p228
      // Predicated region
      $region41: #{tpu_custom_call.1} parent=5 // pred_check
        _
      $region42: #{tpu_custom_call.1} parent=5 // pred_check_branch
        %231 = sbr.rel (%p228) target = $region44
      $region43: #{tpu_custom_call.1} parent=5 // pred_region
        %s232 = ssub.s32 %s16, 1
        // Predicated region
        $region45: #{tpu_custom_call.1} parent=43 // pred_check
          %p233 = pneg %p63
        $region46: #{tpu_custom_call.1} parent=43 // pred_check_branch
          %235 = sbr.rel (%p233) target = $region48
        $region47: #{tpu_custom_call.1} parent=43 // pred_region
          %236 = dma.done [#allocation3], 512
        $region48: #{tpu_custom_call.1} parent=43 // pred_fallthru
          _
        %s237 = smul.u32 2, %s21
        %p238 = scmp.lt.s32.totalorder %s237, 3
        %s239 = scalar_select %p238, %s237, 3
        %s240 = smul.addr %s239, 4
        %s241 = scalar_lea.vmem %s0, %s240
        %p242 = pneg %p42
        %p243 = pneg %p39
        %p244 = pneg %p63
        %p245 = pneg %p60
        %p246 = pneg %p84
        %p247 = pneg %p81
        %p248 = pneg %p105
        %p249 = pneg %p102
        %p250 = pneg %p126
        %p251 = pneg %p123
        %p252 = pneg %p147
        %p253 = pneg %p144
        %p254 = pneg %p173
        %p255 = pneg %p170
        %s256 = sand.u32 %s160, 1
        %s257 = scalar_lea.sflag [#allocation4], %s256
        %s258 = sand.u32 %s160, 1
        %s259 = smul.addr %s258, 16
        %s260 = scalar_lea.vmem [#allocation5], %s259
        %s261 = smul.u32 2, %s21
        %p262 = scmp.lt.s32.totalorder %s261, 3
        %s263 = scalar_select %p262, %s261, 3
        %s264 = smul.addr %s263, 4
        %s265 = scalar_lea.vmem %s0, %s264
        %s266 = smul.u32 2, %s21
        %s267 = smul.u32 2, %s21
        %v268 = vld [vmem:[%s265] sm:$0xff]
        %v269 = vld [vmem:[%s2] sm:$0xff]
        %v270 = vld [vmem:[%s4] sm:$0x3f]
        %v272 = vcombine.high %v268, %v268
        %274 = vrot.lane.b32.xlu0 %v268, 17
        %v275 = vpop.permute.xlu0 %274
        %276 = vrot.lane.b32.xlu0 %v272, 17
        %v277 = vpop.permute.xlu0 %276
        %v278 = vlaneseq
        %v279 = vand.u32 %v278, 127
        %vm280 = vcmp.lt.s32.totalorder %v279, 17
        %v281 = vsel %vm280, %v275, %v277
        %v282 = vsel %vm280, %v277, %v275
        %v283 = vld [vmem:[#allocation2] ss:$8 sm:$0x3]
        %v285 = vlaneseq
        %v286 = vshrl.u32 %v285, 7
        %v287 = vsub.s32 0, %v286
        %v288 = vrot.slane %v283, %v287
        %v289 = vlaneseq
        %v290 = vshrl.u32 %v289, 7
        %v291 = vsub.s32 1, %v290
        %v292 = vrot.slane %v283, %v291
        %v295 = vmul.f32 %v282, %v288
        %v296 = vmul.f32 %v281, %v292
        %297 = vrot.lane.b32.xlu0 %v268, 16
        %v298 = vpop.permute.xlu0 %297
        %299 = vrot.lane.b32.xlu0 %v272, 16
        %v300 = vpop.permute.xlu0 %299
        %vm301 = vcmp.lt.s32.totalorder %v279, 16
        %v302 = vsel %vm301, %v298, %v300
        %v303 = vsel %vm301, %v300, %v298
        %s304 = scalar_lea.vmem [#allocation2], 1
        %v305 = vld [vmem:[%s304] ss:$8 sm:$0x3]
        %v307 = vlaneseq
        %v308 = vshrl.u32 %v307, 7
        %v309 = vsub.s32 0, %v308
        %v310 = vrot.slane %v305, %v309
        %v311 = vlaneseq
        %v312 = vshrl.u32 %v311, 7
        %v313 = vsub.s32 1, %v312
        %v314 = vrot.slane %v305, %v313
        %v317 = vmul.f32 %v303, %v310
        %v318 = vmul.f32 %v302, %v314
        %320 = vrot.lane.b32.xlu0 %v269, 124
        %v321 = vpop.permute.xlu0 %320
        %vm322 = vcmask 31744
        %v323 = vsel %vm322, %v321, 0
        %vm325 = vcmask 1043456
        %v327 = vsel %vm325, %v317, 0
        %v330 = vsel %vm325, %v318, 0
        %332 = vmatprep.subr.mxu0 %v330
        %333 = vmatpush1.msra.mxu0 %v327
        %334 = vmatprep.subr.mxu0 0.0
        %335 = vmatpush1.msra.mxu0 0.0
        %336 = vmatprep.subr.mxu0 0.0
        %337 = vmatpush1.msra.mxu0 0.0
        %338 = vmatprep.subr.mxu0 0.0
        %339 = vmatpush1.msra.mxu0 0.0
        %340 = vmatprep.subr.mxu0 0.0
        %341 = vmatpush1.msra.mxu0 0.0
        %342 = vmatprep.subr.mxu0 0.0
        %343 = vmatpush1.msra.mxu0 0.0
        %344 = vmatprep.subr.mxu0 0.0
        %345 = vmatpush1.msra.mxu0 0.0
        %346 = vmatprep.subr.mxu0 0.0
        %347 = vmatpush1.msra.mxu0 0.0
        %348 = vmatprep.subr.mxu0 0.0
        %349 = vmatpush1.msra.mxu0 0.0
        %350 = vmatprep.subr.mxu0 0.0
        %351 = vmatpush1.msra.mxu0 0.0
        %352 = vmatprep.subr.mxu0 0.0
        %353 = vmatpush1.msra.mxu0 0.0
        %354 = vmatprep.subr.mxu0 0.0
        %355 = vmatpush1.msra.mxu0 0.0
        %356 = vmatprep.subr.mxu0 0.0
        %357 = vmatpush1.msra.mxu0 0.0
        %358 = vmatprep.subr.mxu0 0.0
        %359 = vmatpush1.msra.mxu0 0.0
        %360 = vmatprep.subr.mxu0 0.0
        %361 = vmatpush1.msra.mxu0 0.0
        %362 = vmatprep.subr.mxu0 0.0
        %363 = vmatpush1.msra.mxu0 0.0
        %364 = vmatprep.subr.mxu0 0.0
        %365 = vmatpush1.msra.mxu0 0.0
        %366 = vmatprep.subr.mxu0 0.0
        %367 = vmatpush1.msra.mxu0 0.0
        %368 = vmatprep.subr.mxu0 0.0
        %369 = vmatpush1.msra.mxu0 0.0
        %370 = vmatprep.subr.mxu0 0.0
        %371 = vmatpush1.msra.mxu0 0.0
        %372 = vmatprep.subr.mxu0 0.0
        %373 = vmatpush1.msra.mxu0 0.0
        %374 = vmatprep.subr.mxu0 0.0
        %375 = vmatpush1.msra.mxu0 0.0
        %376 = vmatprep.subr.mxu0 0.0
        %377 = vmatpush1.msra.mxu0 0.0
        %378 = vmatprep.subr.mxu0 0.0
        %379 = vmatpush1.msra.mxu0 0.0
        %380 = vmatprep.subr.mxu0 0.0
        %381 = vmatpush1.msra.mxu0 0.0
        %382 = vmatprep.subr.mxu0 0.0
        %383 = vmatpush1.msra.mxu0 0.0
        %384 = vmatprep.subr.mxu0 0.0
        %385 = vmatpush1.msra.mxu0 0.0
        %386 = vmatprep.subr.mxu0 0.0
        %387 = vmatpush1.msra.mxu0 0.0
        %388 = vmatprep.subr.mxu0 0.0
        %389 = vmatpush1.msra.mxu0 0.0
        %390 = vmatprep.subr.mxu0 0.0
        %391 = vmatpush1.msra.mxu0 0.0
        %392 = vmatprep.subr.mxu0 0.0
        %393 = vmatpush1.msra.mxu0 0.0
        %394 = vmatprep.subr.mxu0 0.0
        %395 = vmatpush1.msra.mxu0 0.0
        %396 = vmatprep.mubr.f32.mxu0 0.0
        %397 = vmatmul.mubr.f32.gmra.mrb[0].mxu0 %v323
        %v398 = vpop.f32.mrb[0].mxu0
        %v399 = vadd.f32 0.0, %v398
        %v400 = vpop.f32.mrb[0].mxu0
        %v401 = vadd.f32 0.0, %v400
        %402 = vdwg.mxu0
        %v403 = vsel %vm322, %v269, 0
        %v406 = vsel %vm325, %v295, 0
        %v409 = vsel %vm325, %v296, 0
        %411 = vmatprep.subr.mxu0 %v409
        %412 = vmatpush1.msra.mxu0 %v406
        %413 = vmatprep.subr.mxu0 0.0
        %414 = vmatpush1.msra.mxu0 0.0
        %415 = vmatprep.subr.mxu0 0.0
        %416 = vmatpush1.msra.mxu0 0.0
        %417 = vmatprep.subr.mxu0 0.0
        %418 = vmatpush1.msra.mxu0 0.0
        %419 = vmatprep.subr.mxu0 0.0
        %420 = vmatpush1.msra.mxu0 0.0
        %421 = vmatprep.subr.mxu0 0.0
        %422 = vmatpush1.msra.mxu0 0.0
        %423 = vmatprep.subr.mxu0 0.0
        %424 = vmatpush1.msra.mxu0 0.0
        %425 = vmatprep.subr.mxu0 0.0
        %426 = vmatpush1.msra.mxu0 0.0
        %427 = vmatprep.subr.mxu0 0.0
        %428 = vmatpush1.msra.mxu0 0.0
        %429 = vmatprep.subr.mxu0 0.0
        %430 = vmatpush1.msra.mxu0 0.0
        %431 = vmatprep.subr.mxu0 0.0
        %432 = vmatpush1.msra.mxu0 0.0
        %433 = vmatprep.subr.mxu0 0.0
        %434 = vmatpush1.msra.mxu0 0.0
        %435 = vmatprep.subr.mxu0 0.0
        %436 = vmatpush1.msra.mxu0 0.0
        %437 = vmatprep.subr.mxu0 0.0
        %438 = vmatpush1.msra.mxu0 0.0
        %439 = vmatprep.subr.mxu0 0.0
        %440 = vmatpush1.msra.mxu0 0.0
        %441 = vmatprep.subr.mxu0 0.0
        %442 = vmatpush1.msra.mxu0 0.0
        %443 = vmatprep.subr.mxu0 0.0
        %444 = vmatpush1.msra.mxu0 0.0
        %445 = vmatprep.subr.mxu0 0.0
        %446 = vmatpush1.msra.mxu0 0.0
        %447 = vmatprep.subr.mxu0 0.0
        %448 = vmatpush1.msra.mxu0 0.0
        %449 = vmatprep.subr.mxu0 0.0
        %450 = vmatpush1.msra.mxu0 0.0
        %451 = vmatprep.subr.mxu0 0.0
        %452 = vmatpush1.msra.mxu0 0.0
        %453 = vmatprep.subr.mxu0 0.0
        %454 = vmatpush1.msra.mxu0 0.0
        %455 = vmatprep.subr.mxu0 0.0
        %456 = vmatpush1.msra.mxu0 0.0
        %457 = vmatprep.subr.mxu0 0.0
        %458 = vmatpush1.msra.mxu0 0.0
        %459 = vmatprep.subr.mxu0 0.0
        %460 = vmatpush1.msra.mxu0 0.0
        %461 = vmatprep.subr.mxu0 0.0
        %462 = vmatpush1.msra.mxu0 0.0
        %463 = vmatprep.subr.mxu0 0.0
        %464 = vmatpush1.msra.mxu0 0.0
        %465 = vmatprep.subr.mxu0 0.0
        %466 = vmatpush1.msra.mxu0 0.0
        %467 = vmatprep.subr.mxu0 0.0
        %468 = vmatpush1.msra.mxu0 0.0
        %469 = vmatprep.subr.mxu0 0.0
        %470 = vmatpush1.msra.mxu0 0.0
        %471 = vmatprep.subr.mxu0 0.0
        %472 = vmatpush1.msra.mxu0 0.0
        %473 = vmatprep.subr.mxu0 0.0
        %474 = vmatpush1.msra.mxu0 0.0
        %475 = vmatprep.mubr.f32.mxu0 0.0
        %476 = vmatmul.mubr.f32.gmra.mrb[0].mxu0 %v403
        %v477 = vpop.f32.mrb[0].mxu0
        %v478 = vadd.f32 %v399, %v477
        %v479 = vpop.f32.mrb[0].mxu0
        %v480 = vadd.f32 %v401, %v479
        %481 = vdwg.mxu0
        %482 = vrot.lane.b32.xlu0 %v268, 15
        %v483 = vpop.permute.xlu0 %482
        %484 = vrot.lane.b32.xlu0 %v272, 15
        %v485 = vpop.permute.xlu0 %484
        %vm486 = vcmp.lt.s32.totalorder %v279, 15
        %v487 = vsel %vm486, %v483, %v485
        %v488 = vsel %vm486, %v485, %v483
        %s489 = scalar_lea.vmem [#allocation2], 2
        %v490 = vld [vmem:[%s489] ss:$8 sm:$0x3]
        %v492 = vlaneseq
        %v493 = vshrl.u32 %v492, 7
        %v494 = vsub.s32 0, %v493
        %v495 = vrot.slane %v490, %v494
        %v496 = vlaneseq
        %v497 = vshrl.u32 %v496, 7
        %v498 = vsub.s32 1, %v497
        %v499 = vrot.slane %v490, %v498
        %v502 = vmul.f32 %v488, %v495
        %v503 = vmul.f32 %v487, %v499
        %504 = vrot.lane.b32.xlu0 %v269, 120
        %v505 = vpop.permute.xlu0 %504
        %v506 = vsel %vm322, %v505, 0
        %v509 = vsel %vm325, %v502, 0
        %v512 = vsel %vm325, %v503, 0
        %514 = vmatprep.subr.mxu0 %v512
        %515 = vmatpush1.msra.mxu0 %v509
        %516 = vmatprep.subr.mxu0 0.0
        %517 = vmatpush1.msra.mxu0 0.0
        %518 = vmatprep.subr.mxu0 0.0
        %519 = vmatpush1.msra.mxu0 0.0
        %520 = vmatprep.subr.mxu0 0.0
        %521 = vmatpush1.msra.mxu0 0.0
        %522 = vmatprep.subr.mxu0 0.0
        %523 = vmatpush1.msra.mxu0 0.0
        %524 = vmatprep.subr.mxu0 0.0
        %525 = vmatpush1.msra.mxu0 0.0
        %526 = vmatprep.subr.mxu0 0.0
        %527 = vmatpush1.msra.mxu0 0.0
        %528 = vmatprep.subr.mxu0 0.0
        %529 = vmatpush1.msra.mxu0 0.0
        %530 = vmatprep.subr.mxu0 0.0
        %531 = vmatpush1.msra.mxu0 0.0
        %532 = vmatprep.subr.mxu0 0.0
        %533 = vmatpush1.msra.mxu0 0.0
        %534 = vmatprep.subr.mxu0 0.0
        %535 = vmatpush1.msra.mxu0 0.0
        %536 = vmatprep.subr.mxu0 0.0
        %537 = vmatpush1.msra.mxu0 0.0
        %538 = vmatprep.subr.mxu0 0.0
        %539 = vmatpush1.msra.mxu0 0.0
        %540 = vmatprep.subr.mxu0 0.0
        %541 = vmatpush1.msra.mxu0 0.0
        %542 = vmatprep.subr.mxu0 0.0
        %543 = vmatpush1.msra.mxu0 0.0
        %544 = vmatprep.subr.mxu0 0.0
        %545 = vmatpush1.msra.mxu0 0.0
        %546 = vmatprep.subr.mxu0 0.0
        %547 = vmatpush1.msra.mxu0 0.0
        %548 = vmatprep.subr.mxu0 0.0
        %549 = vmatpush1.msra.mxu0 0.0
        %550 = vmatprep.subr.mxu0 0.0
        %551 = vmatpush1.msra.mxu0 0.0
        %552 = vmatprep.subr.mxu0 0.0
        %553 = vmatpush1.msra.mxu0 0.0
        %554 = vmatprep.subr.mxu0 0.0
        %555 = vmatpush1.msra.mxu0 0.0
        %556 = vmatprep.subr.mxu0 0.0
        %557 = vmatpush1.msra.mxu0 0.0
        %558 = vmatprep.subr.mxu0 0.0
        %559 = vmatpush1.msra.mxu0 0.0
        %560 = vmatprep.subr.mxu0 0.0
        %561 = vmatpush1.msra.mxu0 0.0
        %562 = vmatprep.subr.mxu0 0.0
        %563 = vmatpush1.msra.mxu0 0.0
        %564 = vmatprep.subr.mxu0 0.0
        %565 = vmatpush1.msra.mxu0 0.0
        %566 = vmatprep.subr.mxu0 0.0
        %567 = vmatpush1.msra.mxu0 0.0
        %568 = vmatprep.subr.mxu0 0.0
        %569 = vmatpush1.msra.mxu0 0.0
        %570 = vmatprep.subr.mxu0 0.0
        %571 = vmatpush1.msra.mxu0 0.0
        %572 = vmatprep.subr.mxu0 0.0
        %573 = vmatpush1.msra.mxu0 0.0
        %574 = vmatprep.subr.mxu0 0.0
        %575 = vmatpush1.msra.mxu0 0.0
        %576 = vmatprep.subr.mxu0 0.0
        %577 = vmatpush1.msra.mxu0 0.0
        %578 = vmatprep.mubr.f32.mxu0 0.0
        %579 = vmatmul.mubr.f32.gmra.mrb[0].mxu0 %v506
        %v580 = vpop.f32.mrb[0].mxu0
        %v581 = vadd.f32 0.0, %v580
        %v582 = vpop.f32.mrb[0].mxu0
        %v583 = vadd.f32 0.0, %v582
        %584 = vdwg.mxu0
        %v585 = vadd.f32 %v478, %v581
        %v586 = vadd.f32 %v480, %v583
        %587 = vrot.lane.b32.xlu0 %v268, 1
        %v588 = vpop.permute.xlu0 %587
        %589 = vrot.lane.b32.xlu0 %v272, 1
        %v590 = vpop.permute.xlu0 %589
        %vm591 = vcmp.lt.s32.totalorder %v279, 1
        %v592 = vsel %vm591, %v588, %v590
        %v593 = vsel %vm591, %v590, %v588
        %s594 = scalar_lea.vmem [#allocation2], 3
        %v595 = vld [vmem:[%s594] ss:$8 sm:$0x3]
        %v597 = vlaneseq
        %v598 = vshrl.u32 %v597, 7
        %v599 = vsub.s32 0, %v598
        %v600 = vrot.slane %v595, %v599
        %v601 = vlaneseq
        %v602 = vshrl.u32 %v601, 7
        %v603 = vsub.s32 1, %v602
        %v604 = vrot.slane %v595, %v603
        %v607 = vmul.f32 %v593, %v600
        %v608 = vmul.f32 %v592, %v604
        %609 = vrot.lane.b32.xlu0 %v269, 116
        %v610 = vpop.permute.xlu0 %609
        %v611 = vsel %vm322, %v610, 0
        %v614 = vsel %vm325, %v607, 0
        %v617 = vsel %vm325, %v608, 0
        %619 = vmatprep.subr.mxu0 %v617
        %620 = vmatpush1.msra.mxu0 %v614
        %621 = vmatprep.subr.mxu0 0.0
        %622 = vmatpush1.msra.mxu0 0.0
        %623 = vmatprep.subr.mxu0 0.0
        %624 = vmatpush1.msra.mxu0 0.0
        %625 = vmatprep.subr.mxu0 0.0
        %626 = vmatpush1.msra.mxu0 0.0
        %627 = vmatprep.subr.mxu0 0.0
        %628 = vmatpush1.msra.mxu0 0.0
        %629 = vmatprep.subr.mxu0 0.0
        %630 = vmatpush1.msra.mxu0 0.0
        %631 = vmatprep.subr.mxu0 0.0
        %632 = vmatpush1.msra.mxu0 0.0
        %633 = vmatprep.subr.mxu0 0.0
        %634 = vmatpush1.msra.mxu0 0.0
        %635 = vmatprep.subr.mxu0 0.0
        %636 = vmatpush1.msra.mxu0 0.0
        %637 = vmatprep.subr.mxu0 0.0
        %638 = vmatpush1.msra.mxu0 0.0
        %639 = vmatprep.subr.mxu0 0.0
        %640 = vmatpush1.msra.mxu0 0.0
        %641 = vmatprep.subr.mxu0 0.0
        %642 = vmatpush1.msra.mxu0 0.0
        %643 = vmatprep.subr.mxu0 0.0
        %644 = vmatpush1.msra.mxu0 0.0
        %645 = vmatprep.subr.mxu0 0.0
        %646 = vmatpush1.msra.mxu0 0.0
        %647 = vmatprep.subr.mxu0 0.0
        %648 = vmatpush1.msra.mxu0 0.0
        %649 = vmatprep.subr.mxu0 0.0
        %650 = vmatpush1.msra.mxu0 0.0
        %651 = vmatprep.subr.mxu0 0.0
        %652 = vmatpush1.msra.mxu0 0.0
        %653 = vmatprep.subr.mxu0 0.0
        %654 = vmatpush1.msra.mxu0 0.0
        %655 = vmatprep.subr.mxu0 0.0
        %656 = vmatpush1.msra.mxu0 0.0
        %657 = vmatprep.subr.mxu0 0.0
        %658 = vmatpush1.msra.mxu0 0.0
        %659 = vmatprep.subr.mxu0 0.0
        %660 = vmatpush1.msra.mxu0 0.0
        %661 = vmatprep.subr.mxu0 0.0
        %662 = vmatpush1.msra.mxu0 0.0
        %663 = vmatprep.subr.mxu0 0.0
        %664 = vmatpush1.msra.mxu0 0.0
        %665 = vmatprep.subr.mxu0 0.0
        %666 = vmatpush1.msra.mxu0 0.0
        %667 = vmatprep.subr.mxu0 0.0
        %668 = vmatpush1.msra.mxu0 0.0
        %669 = vmatprep.subr.mxu0 0.0
        %670 = vmatpush1.msra.mxu0 0.0
        %671 = vmatprep.subr.mxu0 0.0
        %672 = vmatpush1.msra.mxu0 0.0
        %673 = vmatprep.subr.mxu0 0.0
        %674 = vmatpush1.msra.mxu0 0.0
        %675 = vmatprep.subr.mxu0 0.0
        %676 = vmatpush1.msra.mxu0 0.0
        %677 = vmatprep.subr.mxu0 0.0
        %678 = vmatpush1.msra.mxu0 0.0
        %679 = vmatprep.subr.mxu0 0.0
        %680 = vmatpush1.msra.mxu0 0.0
        %681 = vmatprep.subr.mxu0 0.0
        %682 = vmatpush1.msra.mxu0 0.0
        %683 = vmatprep.mubr.f32.mxu0 0.0
        %684 = vmatmul.mubr.f32.gmra.mrb[0].mxu0 %v611
        %v685 = vpop.f32.mrb[0].mxu0
        %v686 = vadd.f32 0.0, %v685
        %v687 = vpop.f32.mrb[0].mxu0
        %v688 = vadd.f32 0.0, %v687
        %689 = vdwg.mxu0
        %v690 = vadd.f32 %v585, %v686
        %v691 = vadd.f32 %v586, %v688
        %692 = vrot.lane.b32.xlu0 %v269, 112
        %v693 = vpop.permute.xlu0 %692
        %v694 = vsel %vm322, %v693, 0
        %v696 = vsel %vm325, %v268, 0
        %v698 = vsel %vm325, %v272, 0
        %700 = vmatprep.subr.mxu0 %v698
        %701 = vmatpush1.msra.mxu0 %v696
        %702 = vmatprep.subr.mxu0 0.0
        %703 = vmatpush1.msra.mxu0 0.0
        %704 = vmatprep.subr.mxu0 0.0
        %705 = vmatpush1.msra.mxu0 0.0
        %706 = vmatprep.subr.mxu0 0.0
        %707 = vmatpush1.msra.mxu0 0.0
        %708 = vmatprep.subr.mxu0 0.0
        %709 = vmatpush1.msra.mxu0 0.0
        %710 = vmatprep.subr.mxu0 0.0
        %711 = vmatpush1.msra.mxu0 0.0
        %712 = vmatprep.subr.mxu0 0.0
        %713 = vmatpush1.msra.mxu0 0.0
        %714 = vmatprep.subr.mxu0 0.0
        %715 = vmatpush1.msra.mxu0 0.0
        %716 = vmatprep.subr.mxu0 0.0
        %717 = vmatpush1.msra.mxu0 0.0
        %718 = vmatprep.subr.mxu0 0.0
        %719 = vmatpush1.msra.mxu0 0.0
        %720 = vmatprep.subr.mxu0 0.0
        %721 = vmatpush1.msra.mxu0 0.0
        %722 = vmatprep.subr.mxu0 0.0
        %723 = vmatpush1.msra.mxu0 0.0
        %724 = vmatprep.subr.mxu0 0.0
        %725 = vmatpush1.msra.mxu0 0.0
        %726 = vmatprep.subr.mxu0 0.0
        %727 = vmatpush1.msra.mxu0 0.0
        %728 = vmatprep.subr.mxu0 0.0
        %729 = vmatpush1.msra.mxu0 0.0
        %730 = vmatprep.subr.mxu0 0.0
        %731 = vmatpush1.msra.mxu0 0.0
        %732 = vmatprep.subr.mxu0 0.0
        %733 = vmatpush1.msra.mxu0 0.0
        %734 = vmatprep.subr.mxu0 0.0
        %735 = vmatpush1.msra.mxu0 0.0
        %736 = vmatprep.subr.mxu0 0.0
        %737 = vmatpush1.msra.mxu0 0.0
        %738 = vmatprep.subr.mxu0 0.0
        %739 = vmatpush1.msra.mxu0 0.0
        %740 = vmatprep.subr.mxu0 0.0
        %741 = vmatpush1.msra.mxu0 0.0
        %742 = vmatprep.subr.mxu0 0.0
        %743 = vmatpush1.msra.mxu0 0.0
        %744 = vmatprep.subr.mxu0 0.0
        %745 = vmatpush1.msra.mxu0 0.0
        %746 = vmatprep.subr.mxu0 0.0
        %747 = vmatpush1.msra.mxu0 0.0
        %748 = vmatprep.subr.mxu0 0.0
        %749 = vmatpush1.msra.mxu0 0.0
        %750 = vmatprep.subr.mxu0 0.0
        %751 = vmatpush1.msra.mxu0 0.0
        %752 = vmatprep.subr.mxu0 0.0
        %753 = vmatpush1.msra.mxu0 0.0
        %754 = vmatprep.subr.mxu0 0.0
        %755 = vmatpush1.msra.mxu0 0.0
        %756 = vmatprep.subr.mxu0 0.0
        %757 = vmatpush1.msra.mxu0 0.0
        %758 = vmatprep.subr.mxu0 0.0
        %759 = vmatpush1.msra.mxu0 0.0
        %760 = vmatprep.subr.mxu0 0.0
        %761 = vmatpush1.msra.mxu0 0.0
        %762 = vmatprep.subr.mxu0 0.0
        %763 = vmatpush1.msra.mxu0 0.0
        %764 = vmatprep.mubr.f32.mxu0 0.0
        %765 = vmatmul.mubr.f32.gmra.mrb[0].mxu0 %v694
        %v766 = vpop.f32.mrb[0].mxu0
        %v767 = vadd.f32 0.0, %v766
        %v768 = vpop.f32.mrb[0].mxu0
        %v769 = vadd.f32 0.0, %v768
        %770 = vdwg.mxu0
        %v771 = vadd.f32 %v690, %v767
        %v772 = vadd.f32 %v691, %v769
        %773 = vrot.lane.b32.xlu0 %v268, 127
        %v774 = vpop.permute.xlu0 %773
        %775 = vrot.lane.b32.xlu0 %v272, 127
        %v776 = vpop.permute.xlu0 %775
        %vm777 = vcmp.lt.s32.totalorder %v279, 127
        %v778 = vsel %vm777, %v774, %v776
        %v779 = vsel %vm777, %v776, %v774
        %s780 = scalar_lea.vmem [#allocation2], 5
        %v781 = vld [vmem:[%s780] ss:$8 sm:$0x3]
        %v783 = vlaneseq
        %v784 = vshrl.u32 %v783, 7
        %v785 = vsub.s32 0, %v784
        %v786 = vrot.slane %v781, %v785
        %v787 = vlaneseq
        %v788 = vshrl.u32 %v787, 7
        %v789 = vsub.s32 1, %v788
        %v790 = vrot.slane %v781, %v789
        %v793 = vmul.f32 %v778, %v786
        %v794 = vmul.f32 %v779, %v790
        %795 = vrot.lane.b32.xlu0 %v269, 108
        %v796 = vpop.permute.xlu0 %795
        %v797 = vsel %vm322, %v796, 0
        %v800 = vsel %vm325, %v793, 0
        %v803 = vsel %vm325, %v794, 0
        %805 = vmatprep.subr.mxu0 %v803
        %806 = vmatpush1.msra.mxu0 %v800
        %807 = vmatprep.subr.mxu0 0.0
        %808 = vmatpush1.msra.mxu0 0.0
        %809 = vmatprep.subr.mxu0 0.0
        %810 = vmatpush1.msra.mxu0 0.0
        %811 = vmatprep.subr.mxu0 0.0
        %812 = vmatpush1.msra.mxu0 0.0
        %813 = vmatprep.subr.mxu0 0.0
        %814 = vmatpush1.msra.mxu0 0.0
        %815 = vmatprep.subr.mxu0 0.0
        %816 = vmatpush1.msra.mxu0 0.0
        %817 = vmatprep.subr.mxu0 0.0
        %818 = vmatpush1.msra.mxu0 0.0
        %819 = vmatprep.subr.mxu0 0.0
        %820 = vmatpush1.msra.mxu0 0.0
        %821 = vmatprep.subr.mxu0 0.0
        %822 = vmatpush1.msra.mxu0 0.0
        %823 = vmatprep.subr.mxu0 0.0
        %824 = vmatpush1.msra.mxu0 0.0
        %825 = vmatprep.subr.mxu0 0.0
        %826 = vmatpush1.msra.mxu0 0.0
        %827 = vmatprep.subr.mxu0 0.0
        %828 = vmatpush1.msra.mxu0 0.0
        %829 = vmatprep.subr.mxu0 0.0
        %830 = vmatpush1.msra.mxu0 0.0
        %831 = vmatprep.subr.mxu0 0.0
        %832 = vmatpush1.msra.mxu0 0.0
        %833 = vmatprep.subr.mxu0 0.0
        %834 = vmatpush1.msra.mxu0 0.0
        %835 = vmatprep.subr.mxu0 0.0
        %836 = vmatpush1.msra.mxu0 0.0
        %837 = vmatprep.subr.mxu0 0.0
        %838 = vmatpush1.msra.mxu0 0.0
        %839 = vmatprep.subr.mxu0 0.0
        %840 = vmatpush1.msra.mxu0 0.0
        %841 = vmatprep.subr.mxu0 0.0
        %842 = vmatpush1.msra.mxu0 0.0
        %843 = vmatprep.subr.mxu0 0.0
        %844 = vmatpush1.msra.mxu0 0.0
        %845 = vmatprep.subr.mxu0 0.0
        %846 = vmatpush1.msra.mxu0 0.0
        %847 = vmatprep.subr.mxu0 0.0
        %848 = vmatpush1.msra.mxu0 0.0
        %849 = vmatprep.subr.mxu0 0.0
        %850 = vmatpush1.msra.mxu0 0.0
        %851 = vmatprep.subr.mxu0 0.0
        %852 = vmatpush1.msra.mxu0 0.0
        %853 = vmatprep.subr.mxu0 0.0
        %854 = vmatpush1.msra.mxu0 0.0
        %855 = vmatprep.subr.mxu0 0.0
        %856 = vmatpush1.msra.mxu0 0.0
        %857 = vmatprep.subr.mxu0 0.0
        %858 = vmatpush1.msra.mxu0 0.0
        %859 = vmatprep.subr.mxu0 0.0
        %860 = vmatpush1.msra.mxu0 0.0
        %861 = vmatprep.subr.mxu0 0.0
        %862 = vmatpush1.msra.mxu0 0.0
        %863 = vmatprep.subr.mxu0 0.0
        %864 = vmatpush1.msra.mxu0 0.0
        %865 = vmatprep.subr.mxu0 0.0
        %866 = vmatpush1.msra.mxu0 0.0
        %867 = vmatprep.subr.mxu0 0.0
        %868 = vmatpush1.msra.mxu0 0.0
        %869 = vmatprep.mubr.f32.mxu0 0.0
        %870 = vmatmul.mubr.f32.gmra.mrb[0].mxu0 %v797
        %v871 = vpop.f32.mrb[0].mxu0
        %v872 = vadd.f32 0.0, %v871
        %v873 = vpop.f32.mrb[0].mxu0
        %v874 = vadd.f32 0.0, %v873
        %875 = vdwg.mxu0
        %v876 = vadd.f32 %v771, %v872
        %v877 = vadd.f32 %v772, %v874
        %878 = vrot.lane.b32.xlu0 %v268, 113
        %v879 = vpop.permute.xlu0 %878
        %880 = vrot.lane.b32.xlu0 %v272, 113
        %v881 = vpop.permute.xlu0 %880
        %vm882 = vcmp.lt.s32.totalorder %v279, 113
        %v883 = vsel %vm882, %v879, %v881
        %v884 = vsel %vm882, %v881, %v879
        %s885 = scalar_lea.vmem [#allocation2], 6
        %v886 = vld [vmem:[%s885] ss:$8 sm:$0x3]
        %v888 = vlaneseq
        %v889 = vshrl.u32 %v888, 7
        %v890 = vsub.s32 0, %v889
        %v891 = vrot.slane %v886, %v890
        %v892 = vlaneseq
        %v893 = vshrl.u32 %v892, 7
        %v894 = vsub.s32 1, %v893
        %v895 = vrot.slane %v886, %v894
        %v898 = vmul.f32 %v883, %v891
        %v899 = vmul.f32 %v884, %v895
        %900 = vrot.lane.b32.xlu0 %v269, 104
        %v901 = vpop.permute.xlu0 %900
        %v902 = vsel %vm322, %v901, 0
        %v905 = vsel %vm325, %v898, 0
        %v908 = vsel %vm325, %v899, 0
        %910 = vmatprep.subr.mxu0 %v908
        %911 = vmatpush1.msra.mxu0 %v905
        %912 = vmatprep.subr.mxu0 0.0
        %913 = vmatpush1.msra.mxu0 0.0
        %914 = vmatprep.subr.mxu0 0.0
        %915 = vmatpush1.msra.mxu0 0.0
        %916 = vmatprep.subr.mxu0 0.0
        %917 = vmatpush1.msra.mxu0 0.0
        %918 = vmatprep.subr.mxu0 0.0
        %919 = vmatpush1.msra.mxu0 0.0
        %920 = vmatprep.subr.mxu0 0.0
        %921 = vmatpush1.msra.mxu0 0.0
        %922 = vmatprep.subr.mxu0 0.0
        %923 = vmatpush1.msra.mxu0 0.0
        %924 = vmatprep.subr.mxu0 0.0
        %925 = vmatpush1.msra.mxu0 0.0
        %926 = vmatprep.subr.mxu0 0.0
        %927 = vmatpush1.msra.mxu0 0.0
        %928 = vmatprep.subr.mxu0 0.0
        %929 = vmatpush1.msra.mxu0 0.0
        %930 = vmatprep.subr.mxu0 0.0
        %931 = vmatpush1.msra.mxu0 0.0
        %932 = vmatprep.subr.mxu0 0.0
        %933 = vmatpush1.msra.mxu0 0.0
        %934 = vmatprep.subr.mxu0 0.0
        %935 = vmatpush1.msra.mxu0 0.0
        %936 = vmatprep.subr.mxu0 0.0
        %937 = vmatpush1.msra.mxu0 0.0
        %938 = vmatprep.subr.mxu0 0.0
        %939 = vmatpush1.msra.mxu0 0.0
        %940 = vmatprep.subr.mxu0 0.0
        %941 = vmatpush1.msra.mxu0 0.0
        %942 = vmatprep.subr.mxu0 0.0
        %943 = vmatpush1.msra.mxu0 0.0
        %944 = vmatprep.subr.mxu0 0.0
        %945 = vmatpush1.msra.mxu0 0.0
        %946 = vmatprep.subr.mxu0 0.0
        %947 = vmatpush1.msra.mxu0 0.0
        %948 = vmatprep.subr.mxu0 0.0
        %949 = vmatpush1.msra.mxu0 0.0
        %950 = vmatprep.subr.mxu0 0.0
        %951 = vmatpush1.msra.mxu0 0.0
        %952 = vmatprep.subr.mxu0 0.0
        %953 = vmatpush1.msra.mxu0 0.0
        %954 = vmatprep.subr.mxu0 0.0
        %955 = vmatpush1.msra.mxu0 0.0
        %956 = vmatprep.subr.mxu0 0.0
        %957 = vmatpush1.msra.mxu0 0.0
        %958 = vmatprep.subr.mxu0 0.0
        %959 = vmatpush1.msra.mxu0 0.0
        %960 = vmatprep.subr.mxu0 0.0
        %961 = vmatpush1.msra.mxu0 0.0
        %962 = vmatprep.subr.mxu0 0.0
        %963 = vmatpush1.msra.mxu0 0.0
        %964 = vmatprep.subr.mxu0 0.0
        %965 = vmatpush1.msra.mxu0 0.0
        %966 = vmatprep.subr.mxu0 0.0
        %967 = vmatpush1.msra.mxu0 0.0
        %968 = vmatprep.subr.mxu0 0.0
        %969 = vmatpush1.msra.mxu0 0.0
        %970 = vmatprep.subr.mxu0 0.0
        %971 = vmatpush1.msra.mxu0 0.0
        %972 = vmatprep.subr.mxu0 0.0
        %973 = vmatpush1.msra.mxu0 0.0
        %974 = vmatprep.mubr.f32.mxu0 0.0
        %975 = vmatmul.mubr.f32.gmra.mrb[0].mxu0 %v902
        %v976 = vpop.f32.mrb[0].mxu0
        %v977 = vadd.f32 0.0, %v976
        %v978 = vpop.f32.mrb[0].mxu0
        %v979 = vadd.f32 0.0, %v978
        %980 = vdwg.mxu0
        %v981 = vadd.f32 %v876, %v977
        %v982 = vadd.f32 %v877, %v979
        %983 = vrot.lane.b32.xlu0 %v268, 112
        %v984 = vpop.permute.xlu0 %983
        %985 = vrot.lane.b32.xlu0 %v272, 112
        %v986 = vpop.permute.xlu0 %985
        %vm987 = vcmp.lt.s32.totalorder %v279, 112
        %v988 = vsel %vm987, %v984, %v986
        %v989 = vsel %vm987, %v986, %v984
        %s990 = scalar_lea.vmem [#allocation2], 7
        %v991 = vld [vmem:[%s990] ss:$8 sm:$0x3]
        %v993 = vlaneseq
        %v994 = vshrl.u32 %v993, 7
        %v995 = vsub.s32 0, %v994
        %v996 = vrot.slane %v991, %v995
        %v997 = vlaneseq
        %v998 = vshrl.u32 %v997, 7
        %v999 = vsub.s32 1, %v998
        %v1000 = vrot.slane %v991, %v999
        %v1003 = vmul.f32 %v988, %v996
        %v1004 = vmul.f32 %v989, %v1000
        %1005 = vrot.lane.b32.xlu0 %v269, 100
        %v1006 = vpop.permute.xlu0 %1005
        %v1007 = vsel %vm322, %v1006, 0
        %v1010 = vsel %vm325, %v1003, 0
        %v1013 = vsel %vm325, %v1004, 0
        %1015 = vmatprep.subr.mxu0 %v1013
        %1016 = vmatpush1.msra.mxu0 %v1010
        %1017 = vmatprep.subr.mxu0 0.0
        %1018 = vmatpush1.msra.mxu0 0.0
        %1019 = vmatprep.subr.mxu0 0.0
        %1020 = vmatpush1.msra.mxu0 0.0
        %1021 = vmatprep.subr.mxu0 0.0
        %1022 = vmatpush1.msra.mxu0 0.0
        %1023 = vmatprep.subr.mxu0 0.0
        %1024 = vmatpush1.msra.mxu0 0.0
        %1025 = vmatprep.subr.mxu0 0.0
        %1026 = vmatpush1.msra.mxu0 0.0
        %1027 = vmatprep.subr.mxu0 0.0
        %1028 = vmatpush1.msra.mxu0 0.0
        %1029 = vmatprep.subr.mxu0 0.0
        %1030 = vmatpush1.msra.mxu0 0.0
        %1031 = vmatprep.subr.mxu0 0.0
        %1032 = vmatpush1.msra.mxu0 0.0
        %1033 = vmatprep.subr.mxu0 0.0
        %1034 = vmatpush1.msra.mxu0 0.0
        %1035 = vmatprep.subr.mxu0 0.0
        %1036 = vmatpush1.msra.mxu0 0.0
        %1037 = vmatprep.subr.mxu0 0.0
        %1038 = vmatpush1.msra.mxu0 0.0
        %1039 = vmatprep.subr.mxu0 0.0
        %1040 = vmatpush1.msra.mxu0 0.0
        %1041 = vmatprep.subr.mxu0 0.0
        %1042 = vmatpush1.msra.mxu0 0.0
        %1043 = vmatprep.subr.mxu0 0.0
        %1044 = vmatpush1.msra.mxu0 0.0
        %1045 = vmatprep.subr.mxu0 0.0
        %1046 = vmatpush1.msra.mxu0 0.0
        %1047 = vmatprep.subr.mxu0 0.0
        %1048 = vmatpush1.msra.mxu0 0.0
        %1049 = vmatprep.subr.mxu0 0.0
        %1050 = vmatpush1.msra.mxu0 0.0
        %1051 = vmatprep.subr.mxu0 0.0
        %1052 = vmatpush1.msra.mxu0 0.0
        %1053 = vmatprep.subr.mxu0 0.0
        %1054 = vmatpush1.msra.mxu0 0.0
        %1055 = vmatprep.subr.mxu0 0.0
        %1056 = vmatpush1.msra.mxu0 0.0
        %1057 = vmatprep.subr.mxu0 0.0
        %1058 = vmatpush1.msra.mxu0 0.0
        %1059 = vmatprep.subr.mxu0 0.0
        %1060 = vmatpush1.msra.mxu0 0.0
        %1061 = vmatprep.subr.mxu0 0.0
        %1062 = vmatpush1.msra.mxu0 0.0
        %1063 = vmatprep.subr.mxu0 0.0
        %1064 = vmatpush1.msra.mxu0 0.0
        %1065 = vmatprep.subr.mxu0 0.0
        %1066 = vmatpush1.msra.mxu0 0.0
        %1067 = vmatprep.subr.mxu0 0.0
        %1068 = vmatpush1.msra.mxu0 0.0
        %1069 = vmatprep.subr.mxu0 0.0
        %1070 = vmatpush1.msra.mxu0 0.0
        %1071 = vmatprep.subr.mxu0 0.0
        %1072 = vmatpush1.msra.mxu0 0.0
        %1073 = vmatprep.subr.mxu0 0.0
        %1074 = vmatpush1.msra.mxu0 0.0
        %1075 = vmatprep.subr.mxu0 0.0
        %1076 = vmatpush1.msra.mxu0 0.0
        %1077 = vmatprep.subr.mxu0 0.0
        %1078 = vmatpush1.msra.mxu0 0.0
        %1079 = vmatprep.mubr.f32.mxu0 0.0
        %1080 = vmatmul.mubr.f32.gmra.mrb[0].mxu0 %v1007
        %v1081 = vpop.f32.mrb[0].mxu0
        %v1082 = vadd.f32 0.0, %v1081
        %v1083 = vpop.f32.mrb[0].mxu0
        %v1084 = vadd.f32 0.0, %v1083
        %1085 = vdwg.mxu0
        %v1086 = vadd.f32 %v981, %v1082
        %v1087 = vadd.f32 %v982, %v1084
        %1088 = vrot.lane.b32.xlu0 %v268, 111
        %v1089 = vpop.permute.xlu0 %1088
        %1090 = vrot.lane.b32.xlu0 %v272, 111
        %v1091 = vpop.permute.xlu0 %1090
        %vm1092 = vcmp.lt.s32.totalorder %v279, 111
        %v1093 = vsel %vm1092, %v1089, %v1091
        %v1094 = vsel %vm1092, %v1091, %v1089
        %s1095 = scalar_lea.vmem [#allocation2], 16
        %v1096 = vld [vmem:[%s1095] ss:$8 sm:$0x3]
        %v1098 = vlaneseq
        %v1099 = vshrl.u32 %v1098, 7
        %v1100 = vsub.s32 0, %v1099
        %v1101 = vrot.slane %v1096, %v1100
        %v1102 = vlaneseq
        %v1103 = vshrl.u32 %v1102, 7
        %v1104 = vsub.s32 1, %v1103
        %v1105 = vrot.slane %v1096, %v1104
        %v1108 = vmul.f32 %v1093, %v1101
        %v1109 = vmul.f32 %v1094, %v1105
        %1110 = vrot.lane.b32.xlu0 %v269, 96
        %v1111 = vpop.permute.xlu0 %1110
        %v1112 = vsel %vm322, %v1111, 0
        %v1115 = vsel %vm325, %v1108, 0
        %v1118 = vsel %vm325, %v1109, 0
        %1120 = vmatprep.subr.mxu0 %v1118
        %1121 = vmatpush1.msra.mxu0 %v1115
        %1122 = vmatprep.subr.mxu0 0.0
        %1123 = vmatpush1.msra.mxu0 0.0
        %1124 = vmatprep.subr.mxu0 0.0
        %1125 = vmatpush1.msra.mxu0 0.0
        %1126 = vmatprep.subr.mxu0 0.0
        %1127 = vmatpush1.msra.mxu0 0.0
        %1128 = vmatprep.subr.mxu0 0.0
        %1129 = vmatpush1.msra.mxu0 0.0
        %1130 = vmatprep.subr.mxu0 0.0
        %1131 = vmatpush1.msra.mxu0 0.0
        %1132 = vmatprep.subr.mxu0 0.0
        %1133 = vmatpush1.msra.mxu0 0.0
        %1134 = vmatprep.subr.mxu0 0.0
        %1135 = vmatpush1.msra.mxu0 0.0
        %1136 = vmatprep.subr.mxu0 0.0
        %1137 = vmatpush1.msra.mxu0 0.0
        %1138 = vmatprep.subr.mxu0 0.0
        %1139 = vmatpush1.msra.mxu0 0.0
        %1140 = vmatprep.subr.mxu0 0.0
        %1141 = vmatpush1.msra.mxu0 0.0
        %1142 = vmatprep.subr.mxu0 0.0
        %1143 = vmatpush1.msra.mxu0 0.0
        %1144 = vmatprep.subr.mxu0 0.0
        %1145 = vmatpush1.msra.mxu0 0.0
        %1146 = vmatprep.subr.mxu0 0.0
        %1147 = vmatpush1.msra.mxu0 0.0
        %1148 = vmatprep.subr.mxu0 0.0
        %1149 = vmatpush1.msra.mxu0 0.0
        %1150 = vmatprep.subr.mxu0 0.0
        %1151 = vmatpush1.msra.mxu0 0.0
        %1152 = vmatprep.subr.mxu0 0.0
        %1153 = vmatpush1.msra.mxu0 0.0
        %1154 = vmatprep.subr.mxu0 0.0
        %1155 = vmatpush1.msra.mxu0 0.0
        %1156 = vmatprep.subr.mxu0 0.0
        %1157 = vmatpush1.msra.mxu0 0.0
        %1158 = vmatprep.subr.mxu0 0.0
        %1159 = vmatpush1.msra.mxu0 0.0
        %1160 = vmatprep.subr.mxu0 0.0
        %1161 = vmatpush1.msra.mxu0 0.0
        %1162 = vmatprep.subr.mxu0 0.0
        %1163 = vmatpush1.msra.mxu0 0.0
        %1164 = vmatprep.subr.mxu0 0.0
        %1165 = vmatpush1.msra.mxu0 0.0
        %1166 = vmatprep.subr.mxu0 0.0
        %1167 = vmatpush1.msra.mxu0 0.0
        %1168 = vmatprep.subr.mxu0 0.0
        %1169 = vmatpush1.msra.mxu0 0.0
        %1170 = vmatprep.subr.mxu0 0.0
        %1171 = vmatpush1.msra.mxu0 0.0
        %1172 = vmatprep.subr.mxu0 0.0
        %1173 = vmatpush1.msra.mxu0 0.0
        %1174 = vmatprep.subr.mxu0 0.0
        %1175 = vmatpush1.msra.mxu0 0.0
        %1176 = vmatprep.subr.mxu0 0.0
        %1177 = vmatpush1.msra.mxu0 0.0
        %1178 = vmatprep.subr.mxu0 0.0
        %1179 = vmatpush1.msra.mxu0 0.0
        %1180 = vmatprep.subr.mxu0 0.0
        %1181 = vmatpush1.msra.mxu0 0.0
        %1182 = vmatprep.subr.mxu0 0.0
        %1183 = vmatpush1.msra.mxu0 0.0
        %1184 = vmatprep.mubr.f32.mxu0 0.0
        %1185 = vmatmul.mubr.f32.gmra.mrb[0].mxu0 %v1112
        %v1186 = vpop.f32.mrb[0].mxu0
        %v1187 = vadd.f32 0.0, %v1186
        %v1188 = vpop.f32.mrb[0].mxu0
        %v1189 = vadd.f32 0.0, %v1188
        %1190 = vdwg.mxu0
        %v1191 = vadd.f32 %v1086, %v1187
        %v1192 = vadd.f32 %v1087, %v1189
        %v1193 = vld [vmem:[%s3] sm:$0xff]
        %1195 = vset.pattern.permute.xlu0 0
        %1196 = vperm.xlu0 %1195, %v1193
        %v1197 = vpop.permute.xlu0 %1196
        %v1199 = vadd.f32 %v1191, %v1197
        %v1200 = vadd.f32 %v1192, %v1197
        %v1201 = vmax.f32 %v1199, 0.0
        %v1202 = vmax.f32 %v1200, 0.0
        %1203 = vrot.lane.b32.xlu0 %v1201, 17
        %v1204 = vpop.permute.xlu0 %1203
        %1205 = vrot.lane.b32.xlu0 %v1202, 17
        %v1206 = vpop.permute.xlu0 %1205
        %v1207 = vsel %vm280, %v1204, %v1206
        %v1208 = vsel %vm280, %v1206, %v1204
        %v1209 = vmul.f32 %v1208, %v288
        %v1210 = vmul.f32 %v1207, %v292
        %1211 = vrot.lane.b32.xlu0 %v1201, 16
        %v1212 = vpop.permute.xlu0 %1211
        %1213 = vrot.lane.b32.xlu0 %v1202, 16
        %v1214 = vpop.permute.xlu0 %1213
        %v1215 = vsel %vm301, %v1212, %v1214
        %v1216 = vsel %vm301, %v1214, %v1212
        %v1217 = vmul.f32 %v1216, %v310
        %v1218 = vmul.f32 %v1215, %v314
        %1220 = vrot.lane.b32.xlu0 %v270, 120
        %v1221 = vpop.permute.xlu0 %1220
        %vm1222 = vcmask 64512
        %v1223 = vsel %vm1222, %v1221, 0
        %1225 = vmatprep.subr.mxu0 %v1218
        %1226 = vmatpush1.msra.mxu0 %v1217
        %1227 = vmatprep.subr.mxu0 0.0
        %1228 = vmatpush1.msra.mxu0 0.0
        %1229 = vmatprep.subr.mxu0 0.0
        %1230 = vmatpush1.msra.mxu0 0.0
        %1231 = vmatprep.subr.mxu0 0.0
        %1232 = vmatpush1.msra.mxu0 0.0
        %1233 = vmatprep.subr.mxu0 0.0
        %1234 = vmatpush1.msra.mxu0 0.0
        %1235 = vmatprep.subr.mxu0 0.0
        %1236 = vmatpush1.msra.mxu0 0.0
        %1237 = vmatprep.subr.mxu0 0.0
        %1238 = vmatpush1.msra.mxu0 0.0
        %1239 = vmatprep.subr.mxu0 0.0
        %1240 = vmatpush1.msra.mxu0 0.0
        %1241 = vmatprep.subr.mxu0 0.0
        %1242 = vmatpush1.msra.mxu0 0.0
        %1243 = vmatprep.subr.mxu0 0.0
        %1244 = vmatpush1.msra.mxu0 0.0
        %1245 = vmatprep.subr.mxu0 0.0
        %1246 = vmatpush1.msra.mxu0 0.0
        %1247 = vmatprep.subr.mxu0 0.0
        %1248 = vmatpush1.msra.mxu0 0.0
        %1249 = vmatprep.subr.mxu0 0.0
        %1250 = vmatpush1.msra.mxu0 0.0
        %1251 = vmatprep.subr.mxu0 0.0
        %1252 = vmatpush1.msra.mxu0 0.0
        %1253 = vmatprep.subr.mxu0 0.0
        %1254 = vmatpush1.msra.mxu0 0.0
        %1255 = vmatprep.subr.mxu0 0.0
        %1256 = vmatpush1.msra.mxu0 0.0
        %1257 = vmatprep.subr.mxu0 0.0
        %1258 = vmatpush1.msra.mxu0 0.0
        %1259 = vmatprep.subr.mxu0 0.0
        %1260 = vmatpush1.msra.mxu0 0.0
        %1261 = vmatprep.subr.mxu0 0.0
        %1262 = vmatpush1.msra.mxu0 0.0
        %1263 = vmatprep.subr.mxu0 0.0
        %1264 = vmatpush1.msra.mxu0 0.0
        %1265 = vmatprep.subr.mxu0 0.0
        %1266 = vmatpush1.msra.mxu0 0.0
        %1267 = vmatprep.subr.mxu0 0.0
        %1268 = vmatpush1.msra.mxu0 0.0
        %1269 = vmatprep.subr.mxu0 0.0
        %1270 = vmatpush1.msra.mxu0 0.0
        %1271 = vmatprep.subr.mxu0 0.0
        %1272 = vmatpush1.msra.mxu0 0.0
        %1273 = vmatprep.subr.mxu0 0.0
        %1274 = vmatpush1.msra.mxu0 0.0
        %1275 = vmatprep.subr.mxu0 0.0
        %1276 = vmatpush1.msra.mxu0 0.0
        %1277 = vmatprep.subr.mxu0 0.0
        %1278 = vmatpush1.msra.mxu0 0.0
        %1279 = vmatprep.subr.mxu0 0.0
        %1280 = vmatpush1.msra.mxu0 0.0
        %1281 = vmatprep.subr.mxu0 0.0
        %1282 = vmatpush1.msra.mxu0 0.0
        %1283 = vmatprep.subr.mxu0 0.0
        %1284 = vmatpush1.msra.mxu0 0.0
        %1285 = vmatprep.subr.mxu0 0.0
        %1286 = vmatpush1.msra.mxu0 0.0
        %1287 = vmatprep.subr.mxu0 0.0
        %1288 = vmatpush1.msra.mxu0 0.0
        %1289 = vmatprep.mubr.f32.mxu0 0.0
        %1290 = vmatmul.mubr.f32.gmra.mrb[0].mxu0 %v1223
        %v1291 = vpop.f32.mrb[0].mxu0
        %v1292 = vadd.f32 0.0, %v1291
        %v1293 = vpop.f32.mrb[0].mxu0
        %v1294 = vadd.f32 0.0, %v1293
        %1295 = vdwg.mxu0
        %v1296 = vsel %vm1222, %v270, 0
        %1298 = vmatprep.subr.mxu0 %v1210
        %1299 = vmatpush1.msra.mxu0 %v1209
        %1300 = vmatprep.subr.mxu0 0.0
        %1301 = vmatpush1.msra.mxu0 0.0
        %1302 = vmatprep.subr.mxu0 0.0
        %1303 = vmatpush1.msra.mxu0 0.0
        %1304 = vmatprep.subr.mxu0 0.0
        %1305 = vmatpush1.msra.mxu0 0.0
        %1306 = vmatprep.subr.mxu0 0.0
        %1307 = vmatpush1.msra.mxu0 0.0
        %1308 = vmatprep.subr.mxu0 0.0
        %1309 = vmatpush1.msra.mxu0 0.0
        %1310 = vmatprep.subr.mxu0 0.0
        %1311 = vmatpush1.msra.mxu0 0.0
        %1312 = vmatprep.subr.mxu0 0.0
        %1313 = vmatpush1.msra.mxu0 0.0
        %1314 = vmatprep.subr.mxu0 0.0
        %1315 = vmatpush1.msra.mxu0 0.0
        %1316 = vmatprep.subr.mxu0 0.0
        %1317 = vmatpush1.msra.mxu0 0.0
        %1318 = vmatprep.subr.mxu0 0.0
        %1319 = vmatpush1.msra.mxu0 0.0
        %1320 = vmatprep.subr.mxu0 0.0
        %1321 = vmatpush1.msra.mxu0 0.0
        %1322 = vmatprep.subr.mxu0 0.0
        %1323 = vmatpush1.msra.mxu0 0.0
        %1324 = vmatprep.subr.mxu0 0.0
        %1325 = vmatpush1.msra.mxu0 0.0
        %1326 = vmatprep.subr.mxu0 0.0
        %1327 = vmatpush1.msra.mxu0 0.0
        %1328 = vmatprep.subr.mxu0 0.0
        %1329 = vmatpush1.msra.mxu0 0.0
        %1330 = vmatprep.subr.mxu0 0.0
        %1331 = vmatpush1.msra.mxu0 0.0
        %1332 = vmatprep.subr.mxu0 0.0
        %1333 = vmatpush1.msra.mxu0 0.0
        %1334 = vmatprep.subr.mxu0 0.0
        %1335 = vmatpush1.msra.mxu0 0.0
        %1336 = vmatprep.subr.mxu0 0.0
        %1337 = vmatpush1.msra.mxu0 0.0
        %1338 = vmatprep.subr.mxu0 0.0
        %1339 = vmatpush1.msra.mxu0 0.0
        %1340 = vmatprep.subr.mxu0 0.0
        %1341 = vmatpush1.msra.mxu0 0.0
        %1342 = vmatprep.subr.mxu0 0.0
        %1343 = vmatpush1.msra.mxu0 0.0
        %1344 = vmatprep.subr.mxu0 0.0
        %1345 = vmatpush1.msra.mxu0 0.0
        %1346 = vmatprep.subr.mxu0 0.0
        %1347 = vmatpush1.msra.mxu0 0.0
        %1348 = vmatprep.subr.mxu0 0.0
        %1349 = vmatpush1.msra.mxu0 0.0
        %1350 = vmatprep.subr.mxu0 0.0
        %1351 = vmatpush1.msra.mxu0 0.0
        %1352 = vmatprep.subr.mxu0 0.0
        %1353 = vmatpush1.msra.mxu0 0.0
        %1354 = vmatprep.subr.mxu0 0.0
        %1355 = vmatpush1.msra.mxu0 0.0
        %1356 = vmatprep.subr.mxu0 0.0
        %1357 = vmatpush1.msra.mxu0 0.0
        %1358 = vmatprep.subr.mxu0 0.0
        %1359 = vmatpush1.msra.mxu0 0.0
        %1360 = vmatprep.subr.mxu0 0.0
        %1361 = vmatpush1.msra.mxu0 0.0
        %1362 = vmatprep.mubr.f32.mxu0 0.0
        %1363 = vmatmul.mubr.f32.gmra.mrb[0].mxu0 %v1296
        %v1364 = vpop.f32.mrb[0].mxu0
        %v1365 = vadd.f32 %v1292, %v1364
        %v1366 = vpop.f32.mrb[0].mxu0
        %v1367 = vadd.f32 %v1294, %v1366
        %1368 = vdwg.mxu0
        %1369 = vrot.lane.b32.xlu0 %v1201, 15
        %v1370 = vpop.permute.xlu0 %1369
        %1371 = vrot.lane.b32.xlu0 %v1202, 15
        %v1372 = vpop.permute.xlu0 %1371
        %v1373 = vsel %vm486, %v1370, %v1372
        %v1374 = vsel %vm486, %v1372, %v1370
        %v1375 = vmul.f32 %v1374, %v495
        %v1376 = vmul.f32 %v1373, %v499
        %1377 = vrot.lane.b32.xlu0 %v270, 112
        %v1378 = vpop.permute.xlu0 %1377
        %v1379 = vsel %vm1222, %v1378, 0
        %1381 = vmatprep.subr.mxu0 %v1376
        %1382 = vmatpush1.msra.mxu0 %v1375
        %1383 = vmatprep.subr.mxu0 0.0
        %1384 = vmatpush1.msra.mxu0 0.0
        %1385 = vmatprep.subr.mxu0 0.0
        %1386 = vmatpush1.msra.mxu0 0.0
        %1387 = vmatprep.subr.mxu0 0.0
        %1388 = vmatpush1.msra.mxu0 0.0
        %1389 = vmatprep.subr.mxu0 0.0
        %1390 = vmatpush1.msra.mxu0 0.0
        %1391 = vmatprep.subr.mxu0 0.0
        %1392 = vmatpush1.msra.mxu0 0.0
        %1393 = vmatprep.subr.mxu0 0.0
        %1394 = vmatpush1.msra.mxu0 0.0
        %1395 = vmatprep.subr.mxu0 0.0
        %1396 = vmatpush1.msra.mxu0 0.0
        %1397 = vmatprep.subr.mxu0 0.0
        %1398 = vmatpush1.msra.mxu0 0.0
        %1399 = vmatprep.subr.mxu0 0.0
        %1400 = vmatpush1.msra.mxu0 0.0
        %1401 = vmatprep.subr.mxu0 0.0
        %1402 = vmatpush1.msra.mxu0 0.0
        %1403 = vmatprep.subr.mxu0 0.0
        %1404 = vmatpush1.msra.mxu0 0.0
        %1405 = vmatprep.subr.mxu0 0.0
        %1406 = vmatpush1.msra.mxu0 0.0
        %1407 = vmatprep.subr.mxu0 0.0
        %1408 = vmatpush1.msra.mxu0 0.0
        %1409 = vmatprep.subr.mxu0 0.0
        %1410 = vmatpush1.msra.mxu0 0.0
        %1411 = vmatprep.subr.mxu0 0.0
        %1412 = vmatpush1.msra.mxu0 0.0
        %1413 = vmatprep.subr.mxu0 0.0
        %1414 = vmatpush1.msra.mxu0 0.0
        %1415 = vmatprep.subr.mxu0 0.0
        %1416 = vmatpush1.msra.mxu0 0.0
        %1417 = vmatprep.subr.mxu0 0.0
        %1418 = vmatpush1.msra.mxu0 0.0
        %1419 = vmatprep.subr.mxu0 0.0
        %1420 = vmatpush1.msra.mxu0 0.0
        %1421 = vmatprep.subr.mxu0 0.0
        %1422 = vmatpush1.msra.mxu0 0.0
        %1423 = vmatprep.subr.mxu0 0.0
        %1424 = vmatpush1.msra.mxu0 0.0
        %1425 = vmatprep.subr.mxu0 0.0
        %1426 = vmatpush1.msra.mxu0 0.0
        %1427 = vmatprep.subr.mxu0 0.0
        %1428 = vmatpush1.msra.mxu0 0.0
        %1429 = vmatprep.subr.mxu0 0.0
        %1430 = vmatpush1.msra.mxu0 0.0
        %1431 = vmatprep.subr.mxu0 0.0
        %1432 = vmatpush1.msra.mxu0 0.0
        %1433 = vmatprep.subr.mxu0 0.0
        %1434 = vmatpush1.msra.mxu0 0.0
        %1435 = vmatprep.subr.mxu0 0.0
        %1436 = vmatpush1.msra.mxu0 0.0
        %1437 = vmatprep.subr.mxu0 0.0
        %1438 = vmatpush1.msra.mxu0 0.0
        %1439 = vmatprep.subr.mxu0 0.0
        %1440 = vmatpush1.msra.mxu0 0.0
        %1441 = vmatprep.subr.mxu0 0.0
        %1442 = vmatpush1.msra.mxu0 0.0
        %1443 = vmatprep.subr.mxu0 0.0
        %1444 = vmatpush1.msra.mxu0 0.0
        %1445 = vmatprep.mubr.f32.mxu0 0.0
        %1446 = vmatmul.mubr.f32.gmra.mrb[0].mxu0 %v1379
        %v1447 = vpop.f32.mrb[0].mxu0
        %v1448 = vadd.f32 0.0, %v1447
        %v1449 = vpop.f32.mrb[0].mxu0
        %v1450 = vadd.f32 0.0, %v1449
        %1451 = vdwg.mxu0
        %v1452 = vadd.f32 %v1365, %v1448
        %v1453 = vadd.f32 %v1367, %v1450
        %1454 = vrot.lane.b32.xlu0 %v1201, 1
        %v1455 = vpop.permute.xlu0 %1454
        %1456 = vrot.lane.b32.xlu0 %v1202, 1
        %v1457 = vpop.permute.xlu0 %1456
        %v1458 = vsel %vm591, %v1455, %v1457
        %v1459 = vsel %vm591, %v1457, %v1455
        %v1460 = vmul.f32 %v1459, %v600
        %v1461 = vmul.f32 %v1458, %v604
        %1462 = vrot.lane.b32.xlu0 %v270, 104
        %v1463 = vpop.permute.xlu0 %1462
        %v1464 = vsel %vm1222, %v1463, 0
        %1466 = vmatprep.subr.mxu0 %v1461
        %1467 = vmatpush1.msra.mxu0 %v1460
        %1468 = vmatprep.subr.mxu0 0.0
        %1469 = vmatpush1.msra.mxu0 0.0
        %1470 = vmatprep.subr.mxu0 0.0
        %1471 = vmatpush1.msra.mxu0 0.0
        %1472 = vmatprep.subr.mxu0 0.0
        %1473 = vmatpush1.msra.mxu0 0.0
        %1474 = vmatprep.subr.mxu0 0.0
        %1475 = vmatpush1.msra.mxu0 0.0
        %1476 = vmatprep.subr.mxu0 0.0
        %1477 = vmatpush1.msra.mxu0 0.0
        %1478 = vmatprep.subr.mxu0 0.0
        %1479 = vmatpush1.msra.mxu0 0.0
        %1480 = vmatprep.subr.mxu0 0.0
        %1481 = vmatpush1.msra.mxu0 0.0
        %1482 = vmatprep.subr.mxu0 0.0
        %1483 = vmatpush1.msra.mxu0 0.0
        %1484 = vmatprep.subr.mxu0 0.0
        %1485 = vmatpush1.msra.mxu0 0.0
        %1486 = vmatprep.subr.mxu0 0.0
        %1487 = vmatpush1.msra.mxu0 0.0
        %1488 = vmatprep.subr.mxu0 0.0
        %1489 = vmatpush1.msra.mxu0 0.0
        %1490 = vmatprep.subr.mxu0 0.0
        %1491 = vmatpush1.msra.mxu0 0.0
        %1492 = vmatprep.subr.mxu0 0.0
        %1493 = vmatpush1.msra.mxu0 0.0
        %1494 = vmatprep.subr.mxu0 0.0
        %1495 = vmatpush1.msra.mxu0 0.0
        %1496 = vmatprep.subr.mxu0 0.0
        %1497 = vmatpush1.msra.mxu0 0.0
        %1498 = vmatprep.subr.mxu0 0.0
        %1499 = vmatpush1.msra.mxu0 0.0
        %1500 = vmatprep.subr.mxu0 0.0
        %1501 = vmatpush1.msra.mxu0 0.0
        %1502 = vmatprep.subr.mxu0 0.0
        %1503 = vmatpush1.msra.mxu0 0.0
        %1504 = vmatprep.subr.mxu0 0.0
        %1505 = vmatpush1.msra.mxu0 0.0
        %1506 = vmatprep.subr.mxu0 0.0
        %1507 = vmatpush1.msra.mxu0 0.0
        %1508 = vmatprep.subr.mxu0 0.0
        %1509 = vmatpush1.msra.mxu0 0.0
        %1510 = vmatprep.subr.mxu0 0.0
        %1511 = vmatpush1.msra.mxu0 0.0
        %1512 = vmatprep.subr.mxu0 0.0
        %1513 = vmatpush1.msra.mxu0 0.0
        %1514 = vmatprep.subr.mxu0 0.0
        %1515 = vmatpush1.msra.mxu0 0.0
        %1516 = vmatprep.subr.mxu0 0.0
        %1517 = vmatpush1.msra.mxu0 0.0
        %1518 = vmatprep.subr.mxu0 0.0
        %1519 = vmatpush1.msra.mxu0 0.0
        %1520 = vmatprep.subr.mxu0 0.0
        %1521 = vmatpush1.msra.mxu0 0.0
        %1522 = vmatprep.subr.mxu0 0.0
        %1523 = vmatpush1.msra.mxu0 0.0
        %1524 = vmatprep.subr.mxu0 0.0
        %1525 = vmatpush1.msra.mxu0 0.0
        %1526 = vmatprep.subr.mxu0 0.0
        %1527 = vmatpush1.msra.mxu0 0.0
        %1528 = vmatprep.subr.mxu0 0.0
        %1529 = vmatpush1.msra.mxu0 0.0
        %1530 = vmatprep.mubr.f32.mxu0 0.0
        %1531 = vmatmul.mubr.f32.gmra.mrb[0].mxu0 %v1464
        %v1532 = vpop.f32.mrb[0].mxu0
        %v1533 = vadd.f32 0.0, %v1532
        %v1534 = vpop.f32.mrb[0].mxu0
        %v1535 = vadd.f32 0.0, %v1534
        %1536 = vdwg.mxu0
        %v1537 = vadd.f32 %v1452, %v1533
        %v1538 = vadd.f32 %v1453, %v1535
        %1539 = vrot.lane.b32.xlu0 %v270, 96
        %v1540 = vpop.permute.xlu0 %1539
        %v1541 = vsel %vm1222, %v1540, 0
        %1543 = vmatprep.subr.mxu0 %v1202
        %1544 = vmatpush1.msra.mxu0 %v1201
        %1545 = vmatprep.subr.mxu0 0.0
        %1546 = vmatpush1.msra.mxu0 0.0
        %1547 = vmatprep.subr.mxu0 0.0
        %1548 = vmatpush1.msra.mxu0 0.0
        %1549 = vmatprep.subr.mxu0 0.0
        %1550 = vmatpush1.msra.mxu0 0.0
        %1551 = vmatprep.subr.mxu0 0.0
        %1552 = vmatpush1.msra.mxu0 0.0
        %1553 = vmatprep.subr.mxu0 0.0
        %1554 = vmatpush1.msra.mxu0 0.0
        %1555 = vmatprep.subr.mxu0 0.0
        %1556 = vmatpush1.msra.mxu0 0.0
        %1557 = vmatprep.subr.mxu0 0.0
        %1558 = vmatpush1.msra.mxu0 0.0
        %1559 = vmatprep.subr.mxu0 0.0
        %1560 = vmatpush1.msra.mxu0 0.0
        %1561 = vmatprep.subr.mxu0 0.0
        %1562 = vmatpush1.msra.mxu0 0.0
        %1563 = vmatprep.subr.mxu0 0.0
        %1564 = vmatpush1.msra.mxu0 0.0
        %1565 = vmatprep.subr.mxu0 0.0
        %1566 = vmatpush1.msra.mxu0 0.0
        %1567 = vmatprep.subr.mxu0 0.0
        %1568 = vmatpush1.msra.mxu0 0.0
        %1569 = vmatprep.subr.mxu0 0.0
        %1570 = vmatpush1.msra.mxu0 0.0
        %1571 = vmatprep.subr.mxu0 0.0
        %1572 = vmatpush1.msra.mxu0 0.0
        %1573 = vmatprep.subr.mxu0 0.0
        %1574 = vmatpush1.msra.mxu0 0.0
        %1575 = vmatprep.subr.mxu0 0.0
        %1576 = vmatpush1.msra.mxu0 0.0
        %1577 = vmatprep.subr.mxu0 0.0
        %1578 = vmatpush1.msra.mxu0 0.0
        %1579 = vmatprep.subr.mxu0 0.0
        %1580 = vmatpush1.msra.mxu0 0.0
        %1581 = vmatprep.subr.mxu0 0.0
        %1582 = vmatpush1.msra.mxu0 0.0
        %1583 = vmatprep.subr.mxu0 0.0
        %1584 = vmatpush1.msra.mxu0 0.0
        %1585 = vmatprep.subr.mxu0 0.0
        %1586 = vmatpush1.msra.mxu0 0.0
        %1587 = vmatprep.subr.mxu0 0.0
        %1588 = vmatpush1.msra.mxu0 0.0
        %1589 = vmatprep.subr.mxu0 0.0
        %1590 = vmatpush1.msra.mxu0 0.0
        %1591 = vmatprep.subr.mxu0 0.0
        %1592 = vmatpush1.msra.mxu0 0.0
        %1593 = vmatprep.subr.mxu0 0.0
        %1594 = vmatpush1.msra.mxu0 0.0
        %1595 = vmatprep.subr.mxu0 0.0
        %1596 = vmatpush1.msra.mxu0 0.0
        %1597 = vmatprep.subr.mxu0 0.0
        %1598 = vmatpush1.msra.mxu0 0.0
        %1599 = vmatprep.subr.mxu0 0.0
        %1600 = vmatpush1.msra.mxu0 0.0
        %1601 = vmatprep.subr.mxu0 0.0
        %1602 = vmatpush1.msra.mxu0 0.0
        %1603 = vmatprep.subr.mxu0 0.0
        %1604 = vmatpush1.msra.mxu0 0.0
        %1605 = vmatprep.subr.mxu0 0.0
        %1606 = vmatpush1.msra.mxu0 0.0
        %1607 = vmatprep.mubr.f32.mxu0 0.0
        %1608 = vmatmul.mubr.f32.gmra.mrb[0].mxu0 %v1541
        %v1609 = vpop.f32.mrb[0].mxu0
        %v1610 = vadd.f32 0.0, %v1609
        %v1611 = vpop.f32.mrb[0].mxu0
        %v1612 = vadd.f32 0.0, %v1611
        %1613 = vdwg.mxu0
        %v1614 = vadd.f32 %v1537, %v1610
        %v1615 = vadd.f32 %v1538, %v1612
        %1616 = vrot.lane.b32.xlu0 %v1201, 127
        %v1617 = vpop.permute.xlu0 %1616
        %1618 = vrot.lane.b32.xlu0 %v1202, 127
        %v1619 = vpop.permute.xlu0 %1618
        %v1620 = vsel %vm777, %v1617, %v1619
        %v1621 = vsel %vm777, %v1619, %v1617
        %v1622 = vmul.f32 %v1620, %v786
        %v1623 = vmul.f32 %v1621, %v790
        %1624 = vrot.lane.b32.xlu0 %v270, 88
        %v1625 = vpop.permute.xlu0 %1624
        %v1626 = vsel %vm1222, %v1625, 0
        %1628 = vmatprep.subr.mxu0 %v1623
        %1629 = vmatpush1.msra.mxu0 %v1622
        %1630 = vmatprep.subr.mxu0 0.0
        %1631 = vmatpush1.msra.mxu0 0.0
        %1632 = vmatprep.subr.mxu0 0.0
        %1633 = vmatpush1.msra.mxu0 0.0
        %1634 = vmatprep.subr.mxu0 0.0
        %1635 = vmatpush1.msra.mxu0 0.0
        %1636 = vmatprep.subr.mxu0 0.0
        %1637 = vmatpush1.msra.mxu0 0.0
        %1638 = vmatprep.subr.mxu0 0.0
        %1639 = vmatpush1.msra.mxu0 0.0
        %1640 = vmatprep.subr.mxu0 0.0
        %1641 = vmatpush1.msra.mxu0 0.0
        %1642 = vmatprep.subr.mxu0 0.0
        %1643 = vmatpush1.msra.mxu0 0.0
        %1644 = vmatprep.subr.mxu0 0.0
        %1645 = vmatpush1.msra.mxu0 0.0
        %1646 = vmatprep.subr.mxu0 0.0
        %1647 = vmatpush1.msra.mxu0 0.0
        %1648 = vmatprep.subr.mxu0 0.0
        %1649 = vmatpush1.msra.mxu0 0.0
        %1650 = vmatprep.subr.mxu0 0.0
        %1651 = vmatpush1.msra.mxu0 0.0
        %1652 = vmatprep.subr.mxu0 0.0
        %1653 = vmatpush1.msra.mxu0 0.0
        %1654 = vmatprep.subr.mxu0 0.0
        %1655 = vmatpush1.msra.mxu0 0.0
        %1656 = vmatprep.subr.mxu0 0.0
        %1657 = vmatpush1.msra.mxu0 0.0
        %1658 = vmatprep.subr.mxu0 0.0
        %1659 = vmatpush1.msra.mxu0 0.0
        %1660 = vmatprep.subr.mxu0 0.0
        %1661 = vmatpush1.msra.mxu0 0.0
        %1662 = vmatprep.subr.mxu0 0.0
        %1663 = vmatpush1.msra.mxu0 0.0
        %1664 = vmatprep.subr.mxu0 0.0
        %1665 = vmatpush1.msra.mxu0 0.0
        %1666 = vmatprep.subr.mxu0 0.0
        %1667 = vmatpush1.msra.mxu0 0.0
        %1668 = vmatprep.subr.mxu0 0.0
        %1669 = vmatpush1.msra.mxu0 0.0
        %1670 = vmatprep.subr.mxu0 0.0
        %1671 = vmatpush1.msra.mxu0 0.0
        %1672 = vmatprep.subr.mxu0 0.0
        %1673 = vmatpush1.msra.mxu0 0.0
        %1674 = vmatprep.subr.mxu0 0.0
        %1675 = vmatpush1.msra.mxu0 0.0
        %1676 = vmatprep.subr.mxu0 0.0
        %1677 = vmatpush1.msra.mxu0 0.0
        %1678 = vmatprep.subr.mxu0 0.0
        %1679 = vmatpush1.msra.mxu0 0.0
        %1680 = vmatprep.subr.mxu0 0.0
        %1681 = vmatpush1.msra.mxu0 0.0
        %1682 = vmatprep.subr.mxu0 0.0
        %1683 = vmatpush1.msra.mxu0 0.0
        %1684 = vmatprep.subr.mxu0 0.0
        %1685 = vmatpush1.msra.mxu0 0.0
        %1686 = vmatprep.subr.mxu0 0.0
        %1687 = vmatpush1.msra.mxu0 0.0
        %1688 = vmatprep.subr.mxu0 0.0
        %1689 = vmatpush1.msra.mxu0 0.0
        %1690 = vmatprep.subr.mxu0 0.0
        %1691 = vmatpush1.msra.mxu0 0.0
        %1692 = vmatprep.mubr.f32.mxu0 0.0
        %1693 = vmatmul.mubr.f32.gmra.mrb[0].mxu0 %v1626
        %v1694 = vpop.f32.mrb[0].mxu0
        %v1695 = vadd.f32 0.0, %v1694
        %v1696 = vpop.f32.mrb[0].mxu0
        %v1697 = vadd.f32 0.0, %v1696
        %1698 = vdwg.mxu0
        %v1699 = vadd.f32 %v1614, %v1695
        %v1700 = vadd.f32 %v1615, %v1697
        %1701 = vrot.lane.b32.xlu0 %v1201, 113
        %v1702 = vpop.permute.xlu0 %1701
        %1703 = vrot.lane.b32.xlu0 %v1202, 113
        %v1704 = vpop.permute.xlu0 %1703
        %v1705 = vsel %vm882, %v1702, %v1704
        %v1706 = vsel %vm882, %v1704, %v1702
        %v1707 = vmul.f32 %v1705, %v891
        %v1708 = vmul.f32 %v1706, %v895
        %1709 = vrot.lane.b32.xlu0 %v270, 80
        %v1710 = vpop.permute.xlu0 %1709
        %v1711 = vsel %vm1222, %v1710, 0
        %1713 = vmatprep.subr.mxu0 %v1708
        %1714 = vmatpush1.msra.mxu0 %v1707
        %1715 = vmatprep.subr.mxu0 0.0
        %1716 = vmatpush1.msra.mxu0 0.0
        %1717 = vmatprep.subr.mxu0 0.0
        %1718 = vmatpush1.msra.mxu0 0.0
        %1719 = vmatprep.subr.mxu0 0.0
        %1720 = vmatpush1.msra.mxu0 0.0
        %1721 = vmatprep.subr.mxu0 0.0
        %1722 = vmatpush1.msra.mxu0 0.0
        %1723 = vmatprep.subr.mxu0 0.0
        %1724 = vmatpush1.msra.mxu0 0.0
        %1725 = vmatprep.subr.mxu0 0.0
        %1726 = vmatpush1.msra.mxu0 0.0
        %1727 = vmatprep.subr.mxu0 0.0
        %1728 = vmatpush1.msra.mxu0 0.0
        %1729 = vmatprep.subr.mxu0 0.0
        %1730 = vmatpush1.msra.mxu0 0.0
        %1731 = vmatprep.subr.mxu0 0.0
        %1732 = vmatpush1.msra.mxu0 0.0
        %1733 = vmatprep.subr.mxu0 0.0
        %1734 = vmatpush1.msra.mxu0 0.0
        %1735 = vmatprep.subr.mxu0 0.0
        %1736 = vmatpush1.msra.mxu0 0.0
        %1737 = vmatprep.subr.mxu0 0.0
        %1738 = vmatpush1.msra.mxu0 0.0
        %1739 = vmatprep.subr.mxu0 0.0
        %1740 = vmatpush1.msra.mxu0 0.0
        %1741 = vmatprep.subr.mxu0 0.0
        %1742 = vmatpush1.msra.mxu0 0.0
        %1743 = vmatprep.subr.mxu0 0.0
        %1744 = vmatpush1.msra.mxu0 0.0
        %1745 = vmatprep.subr.mxu0 0.0
        %1746 = vmatpush1.msra.mxu0 0.0
        %1747 = vmatprep.subr.mxu0 0.0
        %1748 = vmatpush1.msra.mxu0 0.0
        %1749 = vmatprep.subr.mxu0 0.0
        %1750 = vmatpush1.msra.mxu0 0.0
        %1751 = vmatprep.subr.mxu0 0.0
        %1752 = vmatpush1.msra.mxu0 0.0
        %1753 = vmatprep.subr.mxu0 0.0
        %1754 = vmatpush1.msra.mxu0 0.0
        %1755 = vmatprep.subr.mxu0 0.0
        %1756 = vmatpush1.msra.mxu0 0.0
        %1757 = vmatprep.subr.mxu0 0.0
        %1758 = vmatpush1.msra.mxu0 0.0
        %1759 = vmatprep.subr.mxu0 0.0
        %1760 = vmatpush1.msra.mxu0 0.0
        %1761 = vmatprep.subr.mxu0 0.0
        %1762 = vmatpush1.msra.mxu0 0.0
        %1763 = vmatprep.subr.mxu0 0.0
        %1764 = vmatpush1.msra.mxu0 0.0
        %1765 = vmatprep.subr.mxu0 0.0
        %1766 = vmatpush1.msra.mxu0 0.0
        %1767 = vmatprep.subr.mxu0 0.0
        %1768 = vmatpush1.msra.mxu0 0.0
        %1769 = vmatprep.subr.mxu0 0.0
        %1770 = vmatpush1.msra.mxu0 0.0
        %1771 = vmatprep.subr.mxu0 0.0
        %1772 = vmatpush1.msra.mxu0 0.0
        %1773 = vmatprep.subr.mxu0 0.0
        %1774 = vmatpush1.msra.mxu0 0.0
        %1775 = vmatprep.subr.mxu0 0.0
        %1776 = vmatpush1.msra.mxu0 0.0
        %1777 = vmatprep.mubr.f32.mxu0 0.0
        %1778 = vmatmul.mubr.f32.gmra.mrb[0].mxu0 %v1711
        %v1779 = vpop.f32.mrb[0].mxu0
        %v1780 = vadd.f32 0.0, %v1779
        %v1781 = vpop.f32.mrb[0].mxu0
        %v1782 = vadd.f32 0.0, %v1781
        %1783 = vdwg.mxu0
        %v1784 = vadd.f32 %v1699, %v1780
        %v1785 = vadd.f32 %v1700, %v1782
        %1786 = vrot.lane.b32.xlu0 %v1201, 112
        %v1787 = vpop.permute.xlu0 %1786
        %1788 = vrot.lane.b32.xlu0 %v1202, 112
        %v1789 = vpop.permute.xlu0 %1788
        %v1790 = vsel %vm987, %v1787, %v1789
        %v1791 = vsel %vm987, %v1789, %v1787
        %v1792 = vmul.f32 %v1790, %v996
        %v1793 = vmul.f32 %v1791, %v1000
        %1794 = vrot.lane.b32.xlu0 %v270, 72
        %v1795 = vpop.permute.xlu0 %1794
        %v1796 = vsel %vm1222, %v1795, 0
        %1798 = vmatprep.subr.mxu0 %v1793
        %1799 = vmatpush1.msra.mxu0 %v1792
        %1800 = vmatprep.subr.mxu0 0.0
        %1801 = vmatpush1.msra.mxu0 0.0
        %1802 = vmatprep.subr.mxu0 0.0
        %1803 = vmatpush1.msra.mxu0 0.0
        %1804 = vmatprep.subr.mxu0 0.0
        %1805 = vmatpush1.msra.mxu0 0.0
        %1806 = vmatprep.subr.mxu0 0.0
        %1807 = vmatpush1.msra.mxu0 0.0
        %1808 = vmatprep.subr.mxu0 0.0
        %1809 = vmatpush1.msra.mxu0 0.0
        %1810 = vmatprep.subr.mxu0 0.0
        %1811 = vmatpush1.msra.mxu0 0.0
        %1812 = vmatprep.subr.mxu0 0.0
        %1813 = vmatpush1.msra.mxu0 0.0
        %1814 = vmatprep.subr.mxu0 0.0
        %1815 = vmatpush1.msra.mxu0 0.0
        %1816 = vmatprep.subr.mxu0 0.0
        %1817 = vmatpush1.msra.mxu0 0.0
        %1818 = vmatprep.subr.mxu0 0.0
        %1819 = vmatpush1.msra.mxu0 0.0
        %1820 = vmatprep.subr.mxu0 0.0
        %1821 = vmatpush1.msra.mxu0 0.0
        %1822 = vmatprep.subr.mxu0 0.0
        %1823 = vmatpush1.msra.mxu0 0.0
        %1824 = vmatprep.subr.mxu0 0.0
        %1825 = vmatpush1.msra.mxu0 0.0
        %1826 = vmatprep.subr.mxu0 0.0
        %1827 = vmatpush1.msra.mxu0 0.0
        %1828 = vmatprep.subr.mxu0 0.0
        %1829 = vmatpush1.msra.mxu0 0.0
        %1830 = vmatprep.subr.mxu0 0.0
        %1831 = vmatpush1.msra.mxu0 0.0
        %1832 = vmatprep.subr.mxu0 0.0
        %1833 = vmatpush1.msra.mxu0 0.0
        %1834 = vmatprep.subr.mxu0 0.0
        %1835 = vmatpush1.msra.mxu0 0.0
        %1836 = vmatprep.subr.mxu0 0.0
        %1837 = vmatpush1.msra.mxu0 0.0
        %1838 = vmatprep.subr.mxu0 0.0
        %1839 = vmatpush1.msra.mxu0 0.0
        %1840 = vmatprep.subr.mxu0 0.0
        %1841 = vmatpush1.msra.mxu0 0.0
        %1842 = vmatprep.subr.mxu0 0.0
        %1843 = vmatpush1.msra.mxu0 0.0
        %1844 = vmatprep.subr.mxu0 0.0
        %1845 = vmatpush1.msra.mxu0 0.0
        %1846 = vmatprep.subr.mxu0 0.0
        %1847 = vmatpush1.msra.mxu0 0.0
        %1848 = vmatprep.subr.mxu0 0.0
        %1849 = vmatpush1.msra.mxu0 0.0
        %1850 = vmatprep.subr.mxu0 0.0
        %1851 = vmatpush1.msra.mxu0 0.0
        %1852 = vmatprep.subr.mxu0 0.0
        %1853 = vmatpush1.msra.mxu0 0.0
        %1854 = vmatprep.subr.mxu0 0.0
        %1855 = vmatpush1.msra.mxu0 0.0
        %1856 = vmatprep.subr.mxu0 0.0
        %1857 = vmatpush1.msra.mxu0 0.0
        %1858 = vmatprep.subr.mxu0 0.0
        %1859 = vmatpush1.msra.mxu0 0.0
        %1860 = vmatprep.subr.mxu0 0.0
        %1861 = vmatpush1.msra.mxu0 0.0
        %1862 = vmatprep.mubr.f32.mxu0 0.0
        %1863 = vmatmul.mubr.f32.gmra.mrb[0].mxu0 %v1796
        %v1864 = vpop.f32.mrb[0].mxu0
        %v1865 = vadd.f32 0.0, %v1864
        %v1866 = vpop.f32.mrb[0].mxu0
        %v1867 = vadd.f32 0.0, %v1866
        %1868 = vdwg.mxu0
        %v1869 = vadd.f32 %v1784, %v1865
        %v1870 = vadd.f32 %v1785, %v1867
        %1871 = vrot.lane.b32.xlu0 %v1201, 111
        %v1872 = vpop.permute.xlu0 %1871
        %1873 = vrot.lane.b32.xlu0 %v1202, 111
        %v1874 = vpop.permute.xlu0 %1873
        %v1875 = vsel %vm1092, %v1872, %v1874
        %v1876 = vsel %vm1092, %v1874, %v1872
        %v1877 = vmul.f32 %v1875, %v1101
        %v1878 = vmul.f32 %v1876, %v1105
        %1879 = vrot.lane.b32.xlu0 %v270, 64
        %v1880 = vpop.permute.xlu0 %1879
        %v1881 = vsel %vm1222, %v1880, 0
        %1883 = vmatprep.subr.mxu0 %v1878
        %1884 = vmatpush1.msra.mxu0 %v1877
        %1885 = vmatprep.subr.mxu0 0.0
        %1886 = vmatpush1.msra.mxu0 0.0
        %1887 = vmatprep.subr.mxu0 0.0
        %1888 = vmatpush1.msra.mxu0 0.0
        %1889 = vmatprep.subr.mxu0 0.0
        %1890 = vmatpush1.msra.mxu0 0.0
        %1891 = vmatprep.subr.mxu0 0.0
        %1892 = vmatpush1.msra.mxu0 0.0
        %1893 = vmatprep.subr.mxu0 0.0
        %1894 = vmatpush1.msra.mxu0 0.0
        %1895 = vmatprep.subr.mxu0 0.0
        %1896 = vmatpush1.msra.mxu0 0.0
        %1897 = vmatprep.subr.mxu0 0.0
        %1898 = vmatpush1.msra.mxu0 0.0
        %1899 = vmatprep.subr.mxu0 0.0
        %1900 = vmatpush1.msra.mxu0 0.0
        %1901 = vmatprep.subr.mxu0 0.0
        %1902 = vmatpush1.msra.mxu0 0.0
        %1903 = vmatprep.subr.mxu0 0.0
        %1904 = vmatpush1.msra.mxu0 0.0
        %1905 = vmatprep.subr.mxu0 0.0
        %1906 = vmatpush1.msra.mxu0 0.0
        %1907 = vmatprep.subr.mxu0 0.0
        %1908 = vmatpush1.msra.mxu0 0.0
        %1909 = vmatprep.subr.mxu0 0.0
        %1910 = vmatpush1.msra.mxu0 0.0
        %1911 = vmatprep.subr.mxu0 0.0
        %1912 = vmatpush1.msra.mxu0 0.0
        %1913 = vmatprep.subr.mxu0 0.0
        %1914 = vmatpush1.msra.mxu0 0.0
        %1915 = vmatprep.subr.mxu0 0.0
        %1916 = vmatpush1.msra.mxu0 0.0
        %1917 = vmatprep.subr.mxu0 0.0
        %1918 = vmatpush1.msra.mxu0 0.0
        %1919 = vmatprep.subr.mxu0 0.0
        %1920 = vmatpush1.msra.mxu0 0.0
        %1921 = vmatprep.subr.mxu0 0.0
        %1922 = vmatpush1.msra.mxu0 0.0
        %1923 = vmatprep.subr.mxu0 0.0
        %1924 = vmatpush1.msra.mxu0 0.0
        %1925 = vmatprep.subr.mxu0 0.0
        %1926 = vmatpush1.msra.mxu0 0.0
        %1927 = vmatprep.subr.mxu0 0.0
        %1928 = vmatpush1.msra.mxu0 0.0
        %1929 = vmatprep.subr.mxu0 0.0
        %1930 = vmatpush1.msra.mxu0 0.0
        %1931 = vmatprep.subr.mxu0 0.0
        %1932 = vmatpush1.msra.mxu0 0.0
        %1933 = vmatprep.subr.mxu0 0.0
        %1934 = vmatpush1.msra.mxu0 0.0
        %1935 = vmatprep.subr.mxu0 0.0
        %1936 = vmatpush1.msra.mxu0 0.0
        %1937 = vmatprep.subr.mxu0 0.0
        %1938 = vmatpush1.msra.mxu0 0.0
        %1939 = vmatprep.subr.mxu0 0.0
        %1940 = vmatpush1.msra.mxu0 0.0
        %1941 = vmatprep.subr.mxu0 0.0
        %1942 = vmatpush1.msra.mxu0 0.0
        %1943 = vmatprep.subr.mxu0 0.0
        %1944 = vmatpush1.msra.mxu0 0.0
        %1945 = vmatprep.subr.mxu0 0.0
        %1946 = vmatpush1.msra.mxu0 0.0
        %1947 = vmatprep.mubr.f32.mxu0 0.0
        %1948 = vmatmul.mubr.f32.gmra.mrb[0].mxu0 %v1881
        %v1949 = vpop.f32.mrb[0].mxu0
        %v1950 = vadd.f32 0.0, %v1949
        %v1951 = vpop.f32.mrb[0].mxu0
        %v1952 = vadd.f32 0.0, %v1951
        %1953 = vdwg.mxu0
        %v1954 = vadd.f32 %v1869, %v1950
        %v1955 = vadd.f32 %v1870, %v1952
        %1956 = vrot.lane.b32.xlu0 %v270, 56
        %v1957 = vpop.permute.xlu0 %1956
        %v1958 = vsel %vm322, %v1957, 0
        %1960 = vmatprep.subr.mxu0 %v698
        %1961 = vmatpush1.msra.mxu0 %v696
        %1962 = vmatprep.subr.mxu0 0.0
        %1963 = vmatpush1.msra.mxu0 0.0
        %1964 = vmatprep.subr.mxu0 0.0
        %1965 = vmatpush1.msra.mxu0 0.0
        %1966 = vmatprep.subr.mxu0 0.0
        %1967 = vmatpush1.msra.mxu0 0.0
        %1968 = vmatprep.subr.mxu0 0.0
        %1969 = vmatpush1.msra.mxu0 0.0
        %1970 = vmatprep.subr.mxu0 0.0
        %1971 = vmatpush1.msra.mxu0 0.0
        %1972 = vmatprep.subr.mxu0 0.0
        %1973 = vmatpush1.msra.mxu0 0.0
        %1974 = vmatprep.subr.mxu0 0.0
        %1975 = vmatpush1.msra.mxu0 0.0
        %1976 = vmatprep.subr.mxu0 0.0
        %1977 = vmatpush1.msra.mxu0 0.0
        %1978 = vmatprep.subr.mxu0 0.0
        %1979 = vmatpush1.msra.mxu0 0.0
        %1980 = vmatprep.subr.mxu0 0.0
        %1981 = vmatpush1.msra.mxu0 0.0
        %1982 = vmatprep.subr.mxu0 0.0
        %1983 = vmatpush1.msra.mxu0 0.0
        %1984 = vmatprep.subr.mxu0 0.0
        %1985 = vmatpush1.msra.mxu0 0.0
        %1986 = vmatprep.subr.mxu0 0.0
        %1987 = vmatpush1.msra.mxu0 0.0
        %1988 = vmatprep.subr.mxu0 0.0
        %1989 = vmatpush1.msra.mxu0 0.0
        %1990 = vmatprep.subr.mxu0 0.0
        %1991 = vmatpush1.msra.mxu0 0.0
        %1992 = vmatprep.subr.mxu0 0.0
        %1993 = vmatpush1.msra.mxu0 0.0
        %1994 = vmatprep.subr.mxu0 0.0
        %1995 = vmatpush1.msra.mxu0 0.0
        %1996 = vmatprep.subr.mxu0 0.0
        %1997 = vmatpush1.msra.mxu0 0.0
        %1998 = vmatprep.subr.mxu0 0.0
        %1999 = vmatpush1.msra.mxu0 0.0
        %2000 = vmatprep.subr.mxu0 0.0
        %2001 = vmatpush1.msra.mxu0 0.0
        %2002 = vmatprep.subr.mxu0 0.0
        %2003 = vmatpush1.msra.mxu0 0.0
        %2004 = vmatprep.subr.mxu0 0.0
        %2005 = vmatpush1.msra.mxu0 0.0
        %2006 = vmatprep.subr.mxu0 0.0
        %2007 = vmatpush1.msra.mxu0 0.0
        %2008 = vmatprep.subr.mxu0 0.0
        %2009 = vmatpush1.msra.mxu0 0.0
        %2010 = vmatprep.subr.mxu0 0.0
        %2011 = vmatpush1.msra.mxu0 0.0
        %2012 = vmatprep.subr.mxu0 0.0
        %2013 = vmatpush1.msra.mxu0 0.0
        %2014 = vmatprep.subr.mxu0 0.0
        %2015 = vmatpush1.msra.mxu0 0.0
        %2016 = vmatprep.subr.mxu0 0.0
        %2017 = vmatpush1.msra.mxu0 0.0
        %2018 = vmatprep.subr.mxu0 0.0
        %2019 = vmatpush1.msra.mxu0 0.0
        %2020 = vmatprep.subr.mxu0 0.0
        %2021 = vmatpush1.msra.mxu0 0.0
        %2022 = vmatprep.subr.mxu0 0.0
        %2023 = vmatpush1.msra.mxu0 0.0
        %2024 = vmatprep.mubr.f32.mxu0 0.0
        %2025 = vmatmul.mubr.f32.gmra.mrb[0].mxu0 %v1958
        %v2026 = vpop.f32.mrb[0].mxu0
        %v2027 = vadd.f32 0.0, %v2026
        %v2028 = vpop.f32.mrb[0].mxu0
        %v2029 = vadd.f32 0.0, %v2028
        %2030 = vdwg.mxu0
        %v2031 = vadd.f32 %v1954, %v2027
        %v2032 = vadd.f32 %v1955, %v2029
        %v2033 = vld [vmem:[%s5] sm:$0x3f]
        %2035 = vset.pattern.permute.xlu0 0
        %2036 = vperm.xlu0 %2035, %v2033
        %v2037 = vpop.permute.xlu0 %2036
        %v2039 = vadd.f32 %v2031, %v2037
        %v2040 = vadd.f32 %v2032, %v2037
        %v2041 = vmax.f32 %v2039, 0.0
        %v2042 = vmax.f32 %v2040, 0.0
        %2043 = vst [vmem:[%s260] sm:$0x3f] %v2041
        %2044 = vst [vmem:[%s260 + $0x8] sm:$0x3f] %v2042
        %s2045 = sand.u32 %s160, 1
        %s2046 = scalar_lea.sflag [#allocation4], %s2045
        %s2047 = sand.u32 %s160, 1
        %s2048 = smul.addr %s2047, 16
        %s2049 = scalar_lea.vmem [#allocation5], %s2048
        // Predicated region
        $region49: #{tpu_custom_call.1} parent=43 // pred_check
          %p2050 = pneg %p170
        $region50: #{tpu_custom_call.1} parent=43 // pred_check_branch
          %2052 = sbr.rel (%p2050) target = $region52
        $region51: #{tpu_custom_call.1} parent=43 // pred_region
          %s2053 = smul.u32 2, %s21
          %s2055 = ssub.s32 256, 256
          %2056 = vsyncadd %s2046, %s2055
          %s2057 = smul.addr %s2053, 128
          %s2058 = scalar_lea.hbm %s6, %s2057
          %s2060 = sshll.u32 %s2049, 4
          %s2061 = int_to_ptr.vmem [resolvable:$true] %s2060
          %2063 = dma.vmem_to_hbm [thread:$0]  %s2061, 256, %s2058, %s2046
        $region52: #{tpu_custom_call.1} parent=43 // pred_fallthru
          _
      $region44: #{tpu_custom_call.1} parent=5 // pred_fallthru
        _
      %p2064 = scmp.le.s32.totalorder 2, %s16
      // Predicated region
      $region53: #{tpu_custom_call.1} parent=5 // pred_check
        %p2065 = pneg %p2064
      $region54: #{tpu_custom_call.1} parent=5 // pred_check_branch
        %2067 = sbr.rel (%p2065) target = $region56
      $region55: #{tpu_custom_call.1} parent=5 // pred_region
        %s2068 = ssub.s32 %s16, 2
        // Predicated region
        $region57: #{tpu_custom_call.1} parent=55 // pred_check
          %p2069 = pneg %p176
        $region58: #{tpu_custom_call.1} parent=55 // pred_check_branch
          %2071 = sbr.rel (%p2069) target = $region60
        $region59: #{tpu_custom_call.1} parent=55 // pred_region
          %s2072 = sand.u32 %s161, 1
          %s2073 = scalar_lea.sflag [#allocation4], %s2072
          %s2074 = sand.u32 %s161, 1
          %s2075 = smul.addr %s2074, 16
          %s2076 = scalar_lea.vmem [#allocation5], %s2075
          %2077 = dma.done %s2073, 256
        $region60: #{tpu_custom_call.1} parent=55 // pred_fallthru
          _
      $region56: #{tpu_custom_call.1} parent=5 // pred_fallthru
        _
    $region6: #{tpu_custom_call.1} parent=1 // loop_footer
      %s20 = sadd.s32 1, %s16
    $region7: #{tpu_custom_call.1} parent=1 // loop_footer_branch
      %15 = sbr.rel target = $region3
    $region8: #{tpu_custom_call.1} parent=1 // loop_exit
      _
    %2078 = vsyncpa [#allocation3], 1
    %s2079 = scalar_lea.sflag [#allocation3], 1
    %2080 = vsyncpa %s2079, 1
    %2081 = vsyncpa [#allocation4], 1
    %s2082 = scalar_lea.sflag [#allocation4], 1
    %2083 = vsyncpa %s2082, 1

</llo_original>
